<compile_context>
chip_gen: v7x
topology: tpu7x:2x2x1
jax: 0.10.0
libtpu: 0.0.40
codegen_flags: <defaults>
</compile_context>

<pallas_src>
import jax
import jax.numpy as jnp
from jax import lax
from jax.experimental import pallas as pl
from jax.experimental.pallas import tpu as pltpu


def _round_up(x, m):
    return ((x + m - 1) // m) * m


def fold_bn(gamma, beta, mean, var, eps=1e-5):
    s = gamma / jnp.sqrt(var + eps)
    t = beta - mean * s
    return s, t


# ----------------------------------------------------------------------------
# Pallas kernels
# ----------------------------------------------------------------------------
def _tconve_head_kernel(x_ref, wconv_ref, bconv_ref, wfc_ref, bfc_ref, h_ref):
    """conv(as matmul) -> relu -> fc -> relu for the whole (padded) batch."""
    y = jnp.dot(x_ref[...], wconv_ref[...], preferred_element_type=jnp.float32)
    y = jnp.maximum(y + bconv_ref[...], 0.0)                  # (Bp, hidden)
    h = jnp.dot(y, wfc_ref[...], preferred_element_type=jnp.float32)
    h_ref[...] = jnp.maximum(h + bfc_ref[...], 0.0).astype(h_ref.dtype)


def _tconve_score_kernel(h_ref, et_ref, bent_ref, out_ref):
    """Entity logits for one entity tile: h @ E^T + b (lane-dense bf16 store).

    No cross-tile state -> the entity grid axis is safely "parallel".
    Sigmoid is monotonic and is applied outside the kernel.
    """
    logits = jnp.dot(h_ref[...], et_ref[...],
                     preferred_element_type=jnp.float32)
    out_ref[...] = (logits + bent_ref[...]).astype(out_ref.dtype)


# ----------------------------------------------------------------------------
# Wrapper: weight folding + pallas_call construction
# ----------------------------------------------------------------------------
def make_tconve_forward(params, dims, ent_tile_max=16384):
    (B, emb_dim1, emb_dim2, embedding_dim, hidden_size) = dims
    Hs, Ws = 3 * emb_dim1, emb_dim2
    Ho, Wo = Hs - 2, Ws - 2
    n_ch = params["conv_w"].shape[0]                     # 32
    assert hidden_size == n_ch * Ho * Wo
    in_dim = 3 * embedding_dim

    conv_w = params["conv_w"].astype(jnp.float32)        # (32, 1, 3, 3)
    conv_b = params["conv_b"].astype(jnp.float32)        # (32,)
    fc_w = params["fc_w"].astype(jnp.float32)            # (emb, hidden)
    fc_b = params["fc_b"].astype(jnp.float32)            # (emb,)
    emb_e = params["emb_e"].astype(jnp.float32)          # (n_ent, emb)
    b_ent = params["b"].astype(jnp.float32)              # (n_ent,)
    s0, t0 = fold_bn(*params["bn0"])                     # 1-channel scalar
    s1, t1 = fold_bn(*params["bn1"])                     # (32,)
    s2, t2 = fold_bn(*params["bn2"])                     # (emb,)

    # ---- fold bn0 + conv bias + bn1 into a dense (in_dim, hidden) matrix ----
    w_fold = conv_w * (s1.reshape(n_ch, 1, 1, 1) * s0)   # W' = s1*s0*W
    b_fold = s1 * (t0 * conv_w.reshape(n_ch, -1).sum(1) + conv_b) + t1
    # Dense conv matrix = folded conv applied to the identity basis of the
    # stacked (Hs, Ws) image; columns come out in NCHW flatten order (c,ho,wo),
    # exactly matching torch's x.view(B, -1) -> fc, so no runtime reorder.
    eye = jnp.eye(Hs * Ws, dtype=jnp.float32).reshape(Hs * Ws, 1, Hs, Ws)
    cols = lax.conv_general_dilated(
        eye, w_fold, (1, 1), "VALID",
        dimension_numbers=("NCHW", "OIHW", "NCHW"))      # (Hs*Ws, 32, Ho, Wo)
    w_conv = cols.reshape(in_dim, hidden_size)           # (96, 1920)
    b_conv = jnp.repeat(b_fold, Ho * Wo).reshape(1, hidden_size)

    # ---- fold bn2 into fc ---------------------------------------------------
    w_fc = (fc_w * s2[:, None]).T                        # (hidden, emb)
    b_fc = (fc_b * s2 + t2).reshape(1, embedding_dim)

    # ---- pad batch to sublane multiple, entities to lane multiple -----------
    Bp = _round_up(max(B, 8), 8)
    n_ent = emb_e.shape[0]
    n_ent_128 = _round_up(n_ent, 128)
    # Large lane-dense entity tiles: step overhead amortized; working set is
    # only a few MiB even at 16k columns in bf16.
    ent_tile = min(ent_tile_max, n_ent_128)
    n_ent_pad = _round_up(n_ent_128, ent_tile)
    # bf16 halves the dominant HBM stream; MXU accumulates in f32.
    e_t = jnp.pad(emb_e.T,
                  ((0, 0), (0, n_ent_pad - n_ent))).astype(jnp.bfloat16)
    b_e = jnp.pad(b_ent, (0, n_ent_pad - n_ent)).reshape(1, n_ent_pad)

    # ---- head: single-shot pallas_call (conv-matmul -> relu -> fc -> relu) --
    head = pl.pallas_call(
        _tconve_head_kernel,
        out_shape=jax.ShapeDtypeStruct((Bp, embedding_dim), jnp.bfloat16),
        grid=(1,),
        in_specs=[
            pl.BlockSpec((Bp, in_dim), lambda i: (0, 0)),             # x
            pl.BlockSpec((in_dim, hidden_size), lambda i: (0, 0)),    # Wconv
            pl.BlockSpec((1, hidden_size), lambda i: (0, 0)),         # bconv
            pl.BlockSpec((hidden_size, embedding_dim), lambda i: (0, 0)),
            pl.BlockSpec((1, embedding_dim), lambda i: (0, 0)),       # bfc
        ],
        out_specs=pl.BlockSpec((Bp, embedding_dim), lambda i: (0, 0)),
        compiler_params=pltpu.CompilerParams(
            dimension_semantics=("arbitrary",)),
    )

    # ---- entity scoring: tiled, fully parallel grid --------------------------
    grid = (n_ent_pad // ent_tile,)
    cost = pl.CostEstimate(
        flops=2 * Bp * embedding_dim * n_ent_pad,
        transcendentals=0,
        bytes_accessed=(2 * embedding_dim * n_ent_pad      # E^T (bf16)
                        + 4 * n_ent_pad                    # entity bias (f32)
                        + 2 * Bp * n_ent_pad               # logits out (bf16)
                        + 2 * Bp * embedding_dim))         # h (bf16)
    # Explicit VMEM budget: double-buffered e_t / bias / out tiles + h, with
    # headroom.  Keeps large tiles legal on v5e (16 MiB default scoped VMEM)
    # while staying under v7x's 64 MiB physical per-TC VMEM.
    dbuf_bytes = 2 * ent_tile * (embedding_dim * 2 + 4 + Bp * 2) \
        + 2 * Bp * embedding_dim * 2
    vmem_limit = int(min(max(dbuf_bytes + (8 << 20), 32 << 20), 64 << 20))

    score = pl.pallas_call(
        _tconve_score_kernel,
        out_shape=jax.ShapeDtypeStruct((Bp, n_ent_pad), jnp.bfloat16),
        grid=grid,
        in_specs=[
            pl.BlockSpec((Bp, embedding_dim), lambda j: (0, 0)),      # h
            pl.BlockSpec((embedding_dim, ent_tile), lambda j: (0, j)),  # E^T
            pl.BlockSpec((1, ent_tile), lambda j: (0, j)),            # b
        ],
        out_specs=pl.BlockSpec((Bp, ent_tile), lambda j: (0, j)),
        compiler_params=pltpu.CompilerParams(
            dimension_semantics=("parallel",),
            vmem_limit_bytes=vmem_limit),
        cost_estimate=cost,
    )

    def forward(e1, rel, time):
        # torch.cat of the three (B,1,d1,d2) views == feature concat.
        x = jnp.concatenate([e1, rel, time], axis=1).astype(jnp.float32)
        x = jnp.pad(x, ((0, Bp - B), (0, 0)))            # fill 8 sublanes
        h = head(x, w_conv, b_conv, w_fc, b_fc)          # (Bp, emb) bf16
        logits = score(h, e_t, b_e)                      # (Bp, n_ent_pad) bf16
        # sigmoid is monotonic; applied here on the sliced result so the
        # returned values match the PyTorch module's probabilities.
        return jax.nn.sigmoid(logits[:B, :n_ent].astype(jnp.float32))

    return forward


# ----------------------------------------------------------------------------
# Pure-JAX reference mirroring the PyTorch forward (inference)
# ----------------------------------------------------------------------------
def reference_forward(params, dims, e1, rel, time):
    (B, emb_dim1, emb_dim2, embedding_dim, _) = dims
    s0, t0 = fold_bn(*params["bn0"])
    s1, t1 = fold_bn(*params["bn1"])
    s2, t2 = fold_bn(*params["bn2"])
    x = jnp.concatenate(
        [e1.reshape(B, 1, emb_dim1, emb_dim2),
         rel.reshape(B, 1, emb_dim1, emb_dim2),
         time.reshape(B, 1, emb_dim1, emb_dim2)], axis=2)
    x = x * s0 + t0
    out = lax.conv_general_dilated(
        x, params["conv_w"], (1, 1), "VALID",
        dimension_numbers=("NCHW", "OIHW", "NCHW"))
    out = out + params["conv_b"].reshape(1, 32, 1, 1)
    out = out * s1.reshape(1, 32, 1, 1) + t1.reshape(1, 32, 1, 1)
    out = jnp.maximum(out, 0.0)
    flat = out.reshape(B, -1)
    h = flat @ params["fc_w"].T + params["fc_b"]
    h = jnp.maximum(h * s2 + t2, 0.0)
    logits = h @ params["emb_e"].T + params["b"]
    return jax.nn.sigmoid(logits)


# ----------------------------------------------------------------------------
# Main
# ----------------------------------------------------------------------------
if __name__ == "__main__":
    key = jax.random.PRNGKey(0)
    B = 2
    embedding_dim = 32
    emb_dim1 = 4                             # args.embedding_shape1
    emb_dim2 = embedding_dim // emb_dim1     # 8
    num_entities = 64
    num_relations = 8
    Hs, Ws = 3 * emb_dim1, emb_dim2          # 12, 8
    Ho, Wo = Hs - 2, Ws - 2                  # 10, 6
    hidden_size = 32 * Ho * Wo               # args.hidden_size = 1920
    dims = (B, emb_dim1, emb_dim2, embedding_dim, hidden_size)

    ks = jax.random.split(key, 12)

    # forward inputs (e1/rel/time are already-embedded vectors in this forward)
    e1 = jax.random.normal(ks[0], (B, embedding_dim), jnp.float32)
    rel = jax.random.normal(ks[1], (B, embedding_dim), jnp.float32)
    time = jax.random.normal(ks[2], (B, embedding_dim), jnp.float32)

    # deterministic synthetic parameters (shapes from TConvE.__init__)
    def bn_init(k, n):
        k1, k2, k3, k4 = jax.random.split(k, 4)
        gamma = 1.0 + 0.1 * jax.random.normal(k1, (n,), jnp.float32)
        beta = 0.1 * jax.random.normal(k2, (n,), jnp.float32)
        mean = 0.1 * jax.random.normal(k3, (n,), jnp.float32)
        var = 1.0 + 0.1 * jax.random.uniform(k4, (n,), jnp.float32)
        return gamma, beta, mean, var

    emb_e = 0.1 * jax.random.normal(ks[3], (num_entities, embedding_dim), jnp.float32)
    emb_e = emb_e.at[0].set(0.0)             # padding_idx=0
    params = {
        "emb_e": emb_e,
        "conv_w": 0.1 * jax.random.normal(ks[4], (32, 1, 3, 3), jnp.float32),
        "conv_b": 0.1 * jax.random.normal(ks[5], (32,), jnp.float32),
        "fc_w": 0.05 * jax.random.normal(ks[6], (embedding_dim, hidden_size), jnp.float32),
        "fc_b": 0.05 * jax.random.normal(ks[7], (embedding_dim,), jnp.float32),
        "b": jnp.zeros((num_entities,), jnp.float32),   # Parameter(torch.zeros(...))
        "bn0": bn_init(ks[8], 1),
        "bn1": bn_init(ks[9], 32),
        "bn2": bn_init(ks[10], embedding_dim),
    }

    forward = jax.jit(make_tconve_forward(params, dims))
    pred = forward(e1, rel, time)
    pred = jax.block_until_ready(pred)

    ref = reference_forward(params, dims, e1, rel, time)
    assert pred.shape == (B, num_entities)
    assert jnp.all(jnp.isfinite(pred))
    # Tolerance is relaxed vs the pure-f32 reference because E^T / h / logits
    # travel as bf16 (ranking-preserving, per the performance review).
    assert jnp.allclose(pred, ref, rtol=1e-2, atol=1e-2), (
        float(jnp.max(jnp.abs(pred - ref))))

    print("KERNEL_OK")
</pallas_src>

<mosaic_0001>
module attributes {stable_mosaic.version = 11 : i64} {
  func.func @_tconve_score_kernel(%arg0: i32, %arg1: memref<8x32xbf16, #tpu.memory_space<vmem>>, %arg2: memref<32x128xbf16, #tpu.memory_space<vmem>>, %arg3: memref<1x128xf32, #tpu.memory_space<vmem>>, %arg4: memref<8x128xbf16, #tpu.memory_space<vmem>>) attributes {dimension_semantics = [#tpu.dimension_semantics<parallel>], iteration_bounds = array<i64: 1>, scalar_prefetch = 0 : i64, scratch_operands = 0 : i64, tpu.core_type = #tpu.core_type<tc>, window_params = [{pipeline_mode = #tpu.pipeline_mode<synchronous>, transform_indices = @transform_0, window_bounds = array<i64: 8, 32>}, {transform_indices = @transform_1, window_bounds = array<i64: 32, 128>}, {transform_indices = @transform_2, window_bounds = array<i64: 1, 128>}, {transform_indices = @transform_3, window_bounds = array<i64: 8, 128>}]} {
    %c0 = arith.constant 0 : index
    %c0_0 = arith.constant 0 : index
    %0 = vector.load %arg1[%c0, %c0_0] : memref<8x32xbf16, #tpu.memory_space<vmem>>, vector<8x32xbf16>
    %c0_1 = arith.constant 0 : index
    %c0_2 = arith.constant 0 : index
    %1 = vector.load %arg2[%c0_1, %c0_2] : memref<32x128xbf16, #tpu.memory_space<vmem>>, vector<32x128xbf16>
    %cst = arith.constant dense<0.000000e+00> : vector<8x128xf32>
    %2 = tpu.matmul %0, %1, %cst {dimension_numbers = #tpu.dot_dimension_numbers<[1], [0], [0], [1], [0, 0, 1, 1], [], []>} : vector<8x32xbf16>, vector<32x128xbf16>, vector<8x128xf32> -> vector<8x128xf32>
    %c0_3 = arith.constant 0 : index
    %c0_4 = arith.constant 0 : index
    %3 = vector.load %arg3[%c0_3, %c0_4] : memref<1x128xf32, #tpu.memory_space<vmem>>, vector<1x128xf32>
    %4 = vector.broadcast %3 : vector<1x128xf32> to vector<8x128xf32>
    %5 = arith.addf %2, %4 : vector<8x128xf32>
    %6 = arith.truncf %5 : vector<8x128xf32> to vector<8x128xbf16>
    %c0_5 = arith.constant 0 : index
    %c0_6 = arith.constant 0 : index
    %7 = vector.load %arg4[%c0_5, %c0_6] : memref<8x128xbf16, #tpu.memory_space<vmem>>, vector<8x128xbf16>
    tpu.vector_store %arg4[%c0_5, %c0_6], %6 {strides = array<i32>} : memref<8x128xbf16, #tpu.memory_space<vmem>>, vector<8x128xbf16>,
    return
  }
  func.func @transform_0(%arg0: i32) -> (i32, i32) {
    %c0_i32 = arith.constant 0 : i32
    %c0_i32_0 = arith.constant 0 : i32
    %c0_i32_1 = arith.constant 0 : i32
    return %c0_i32, %c0_i32_0 : i32, i32
  }
  func.func @transform_1(%arg0: i32) -> (i32, i32) {
    %c0_i32 = arith.constant 0 : i32
    %c0_i32_0 = arith.constant 0 : i32
    return %c0_i32, %arg0 : i32, i32
  }
  func.func @transform_2(%arg0: i32) -> (i32, i32) {
    %c0_i32 = arith.constant 0 : i32
    %c0_i32_0 = arith.constant 0 : i32
    return %c0_i32, %arg0 : i32, i32
  }
  func.func @transform_3(%arg0: i32) -> (i32, i32) {
    %c0_i32 = arith.constant 0 : i32
    %c0_i32_0 = arith.constant 0 : i32
    return %c0_i32, %arg0 : i32, i32
  }
}

module attributes {stable_mosaic.version = 11 : i64} {
  func.func @_tconve_head_kernel(%arg0: i32, %arg1: memref<8x96xf32, #tpu.memory_space<vmem>>, %arg2: memref<96x1920xf32, #tpu.memory_space<vmem>>, %arg3: memref<1x1920xf32, #tpu.memory_space<vmem>>, %arg4: memref<1920x32xf32, #tpu.memory_space<vmem>>, %arg5: memref<1x32xf32, #tpu.memory_space<vmem>>, %arg6: memref<8x32xbf16, #tpu.memory_space<vmem>>) attributes {dimension_semantics = [#tpu.dimension_semantics<arbitrary>], iteration_bounds = array<i64: 1>, scalar_prefetch = 0 : i64, scratch_operands = 0 : i64, tpu.core_type = #tpu.core_type<tc>, window_params = [{pipeline_mode = #tpu.pipeline_mode<synchronous>, transform_indices = @transform_0, window_bounds = array<i64: 8, 96>}, {pipeline_mode = #tpu.pipeline_mode<synchronous>, transform_indices = @transform_1, window_bounds = array<i64: 96, 1920>}, {pipeline_mode = #tpu.pipeline_mode<synchronous>, transform_indices = @transform_2, window_bounds = array<i64: 1, 1920>}, {pipeline_mode = #tpu.pipeline_mode<synchronous>, transform_indices = @transform_3, window_bounds = array<i64: 1920, 32>}, {pipeline_mode = #tpu.pipeline_mode<synchronous>, transform_indices = @transform_4, window_bounds = array<i64: 1, 32>}, {pipeline_mode = #tpu.pipeline_mode<synchronous>, transform_indices = @transform_5, window_bounds = array<i64: 8, 32>}]} {
    %c0 = arith.constant 0 : index
    %c0_0 = arith.constant 0 : index
    %0 = vector.load %arg1[%c0, %c0_0] : memref<8x96xf32, #tpu.memory_space<vmem>>, vector<8x96xf32>
    %c0_1 = arith.constant 0 : index
    %c0_2 = arith.constant 0 : index
    %1 = vector.load %arg2[%c0_1, %c0_2] : memref<96x1920xf32, #tpu.memory_space<vmem>>, vector<96x1920xf32>
    %cst = arith.constant dense<0.000000e+00> : vector<8x1920xf32>
    %2 = tpu.matmul %0, %1, %cst {dimension_numbers = #tpu.dot_dimension_numbers<[1], [0], [0], [1], [0, 0, 1, 1], [], []>} : vector<8x96xf32>, vector<96x1920xf32>, vector<8x1920xf32> -> vector<8x1920xf32>
    %c0_3 = arith.constant 0 : index
    %c0_4 = arith.constant 0 : index
    %3 = vector.load %arg3[%c0_3, %c0_4] : memref<1x1920xf32, #tpu.memory_space<vmem>>, vector<1x1920xf32>
    %4 = vector.broadcast %3 : vector<1x1920xf32> to vector<8x1920xf32>
    %5 = arith.addf %2, %4 : vector<8x1920xf32>
    %cst_5 = arith.constant 0.000000e+00 : f32
    %6 = vector.broadcast %cst_5 : f32 to vector<8x1920xf32>
    %7 = arith.maximumf %5, %6 : vector<8x1920xf32>
    %c0_6 = arith.constant 0 : index
    %c0_7 = arith.constant 0 : index
    %8 = vector.load %arg4[%c0_6, %c0_7] : memref<1920x32xf32, #tpu.memory_space<vmem>>, vector<1920x32xf32>
    %cst_8 = arith.constant dense<0.000000e+00> : vector<8x32xf32>
    %9 = tpu.matmul %7, %8, %cst_8 {dimension_numbers = #tpu.dot_dimension_numbers<[1], [0], [0], [1], [0, 0, 1, 1], [], []>} : vector<8x1920xf32>, vector<1920x32xf32>, vector<8x32xf32> -> vector<8x32xf32>
    %c0_9 = arith.constant 0 : index
    %c0_10 = arith.constant 0 : index
    %10 = vector.load %arg5[%c0_9, %c0_10] : memref<1x32xf32, #tpu.memory_space<vmem>>, vector<1x32xf32>
    %11 = vector.broadcast %10 : vector<1x32xf32> to vector<8x32xf32>
    %12 = arith.addf %9, %11 : vector<8x32xf32>
    %cst_11 = arith.constant 0.000000e+00 : f32
    %13 = vector.broadcast %cst_11 : f32 to vector<8x32xf32>
    %14 = arith.maximumf %12, %13 : vector<8x32xf32>
    %15 = arith.truncf %14 : vector<8x32xf32> to vector<8x32xbf16>
    %c0_12 = arith.constant 0 : index
    %c0_13 = arith.constant 0 : index
    %16 = vector.load %arg6[%c0_12, %c0_13] : memref<8x32xbf16, #tpu.memory_space<vmem>>, vector<8x32xbf16>
    tpu.vector_store %arg6[%c0_12, %c0_13], %15 {strides = array<i32>} : memref<8x32xbf16, #tpu.memory_space<vmem>>, vector<8x32xbf16>,
    return
  }
  func.func @transform_0(%arg0: i32) -> (i32, i32) {
    %c0_i32 = arith.constant 0 : i32
    %c0_i32_0 = arith.constant 0 : i32
    %c0_i32_1 = arith.constant 0 : i32
    return %c0_i32, %c0_i32_0 : i32, i32
  }
  func.func @transform_1(%arg0: i32) -> (i32, i32) {
    %c0_i32 = arith.constant 0 : i32
    %c0_i32_0 = arith.constant 0 : i32
    %c0_i32_1 = arith.constant 0 : i32
    return %c0_i32, %c0_i32_0 : i32, i32
  }
  func.func @transform_2(%arg0: i32) -> (i32, i32) {
    %c0_i32 = arith.constant 0 : i32
    %c0_i32_0 = arith.constant 0 : i32
    %c0_i32_1 = arith.constant 0 : i32
    return %c0_i32, %c0_i32_0 : i32, i32
  }
  func.func @transform_3(%arg0: i32) -> (i32, i32) {
    %c0_i32 = arith.constant 0 : i32
    %c0_i32_0 = arith.constant 0 : i32
    %c0_i32_1 = arith.constant 0 : i32
    return %c0_i32, %c0_i32_0 : i32, i32
  }
  func.func @transform_4(%arg0: i32) -> (i32, i32) {
    %c0_i32 = arith.constant 0 : i32
    %c0_i32_0 = arith.constant 0 : i32
    %c0_i32_1 = arith.constant 0 : i32
    return %c0_i32, %c0_i32_0 : i32, i32
  }
  func.func @transform_5(%arg0: i32) -> (i32, i32) {
    %c0_i32 = arith.constant 0 : i32
    %c0_i32_0 = arith.constant 0 : i32
    %c0_i32_1 = arith.constant 0 : i32
    return %c0_i32, %c0_i32_0 : i32, i32
  }
}

</mosaic_0001>

<llo_original>
// kernel: forward.3
$region0: #{forward.3}
  #allocation0 [shape = 'u32[]', space=smem, size = 0x4, offset = 0x4, fixed_abs, tag = 'smem constant byte address 0x4 - core index']
  #allocation1 [shape = 'u32[144,128]{1,0:T(1,128)}', space=vmem, size = 0x12000, scoped, tag = 'internal scratch']
  %s0 = inlined_call_operand.vmem [shape: bf16[8,32], index: 0, kind: input, shape index: {}]
  %s1 = inlined_call_operand.vmem [shape: bf16[32,128], index: 1, kind: input, shape index: {}]
  %s2 = inlined_call_operand.vmem [shape: f32[1,128], index: 2, kind: input, shape index: {}]
  %s3 = inlined_call_operand.vmem [shape: bf16[8,128], index: 3, kind: output, shape index: {}]
  %s4 = sld [smem:[#allocation0]]
  $region22: #{forward.3} parent=0
    _
  %s6 = ssub.s32 1, %s4
  %s7 = scalar_select 0, %s6, %s4
  // Predicated region
  $region2: #{forward.3} parent=0 // pred_check
    _
  $region3: #{forward.3} parent=0 // pred_check_branch
    %9 = sbr.rel (0) target = $region5
  $region4: #{forward.3} parent=0 // pred_region
    _
  $region5: #{forward.3} parent=0 // pred_fallthru
    _
  // Predicated region
  $region6: #{forward.3} parent=0 // pred_check
    _
  $region7: #{forward.3} parent=0 // pred_check_branch
    %11 = sbr.rel (0) target = $region9
  $region8: #{forward.3} parent=0 // pred_region
    _
  $region9: #{forward.3} parent=0 // pred_fallthru
    _
  // Predicated region
  $region10: #{forward.3} parent=0 // pred_check
    _
  $region11: #{forward.3} parent=0 // pred_check_branch
    %13 = sbr.rel (0) target = $region13
  $region12: #{forward.3} parent=0 // pred_region
    _
  $region13: #{forward.3} parent=0 // pred_fallthru
    _
  %v15 = vld [vmem:[%s0] sm:$0xf]
  %v16 = vld [vmem:[%s1] sm:$0xf]
  %v17 = vld [vmem:[%s1 + $0x4] sm:$0xf]
  %v18 = vld [vmem:[%s1 + $0x8] sm:$0xf]
  %v19 = vld [vmem:[%s1 + $0xc] sm:$0xf]
  %v20 = vld [vmem:[%s2] sm:$0x1]
  %v22 = vlaneseq
  %v23 = vshrl.u32 %v22, 7
  %v24 = vsub.s32 0, %v23
  %v25 = vrot.slane %v20, %v24
  %v31 = vunpack.c.l.b16 %v16
  %v32 = vunpack.c.l.b16 %v17
  %v33 = vunpack.c.l.b16 %v18
  %v34 = vunpack.c.l.b16 %v19
  %v35 = vpack.c.b16 %v32, %v31
  %v36 = vpack.c.b16 %v34, %v33
  %vm39 = vcmask 261120
  %v41 = vsel %vm39, %v15, 0
  %43 = vmatprep.subr.bf16.mxu0 0
  %44 = vmatpush1.bf16.msra.mxu0 %v35
  %45 = vmatprep.subr.bf16.mxu0 0
  %46 = vmatpush1.bf16.msra.mxu0 %v36
  %47 = vmatprep.subr.bf16.mxu0 0
  %48 = vmatpush1.bf16.msra.mxu0 0
  %49 = vmatprep.subr.bf16.mxu0 0
  %50 = vmatpush1.bf16.msra.mxu0 0
  %51 = vmatprep.subr.bf16.mxu0 0
  %52 = vmatpush1.bf16.msra.mxu0 0
  %53 = vmatprep.subr.bf16.mxu0 0
  %54 = vmatpush1.bf16.msra.mxu0 0
  %55 = vmatprep.subr.bf16.mxu0 0
  %56 = vmatpush1.bf16.msra.mxu0 0
  %57 = vmatprep.subr.bf16.mxu0 0
  %58 = vmatpush1.bf16.msra.mxu0 0
  %59 = vmatprep.subr.bf16.mxu0 0
  %60 = vmatpush1.bf16.msra.mxu0 0
  %61 = vmatprep.subr.bf16.mxu0 0
  %62 = vmatpush1.bf16.msra.mxu0 0
  %63 = vmatprep.subr.bf16.mxu0 0
  %64 = vmatpush1.bf16.msra.mxu0 0
  %65 = vmatprep.subr.bf16.mxu0 0
  %66 = vmatpush1.bf16.msra.mxu0 0
  %67 = vmatprep.subr.bf16.mxu0 0
  %68 = vmatpush1.bf16.msra.mxu0 0
  %69 = vmatprep.subr.bf16.mxu0 0
  %70 = vmatpush1.bf16.msra.mxu0 0
  %71 = vmatprep.subr.bf16.mxu0 0
  %72 = vmatpush1.bf16.msra.mxu0 0
  %73 = vmatprep.subr.bf16.mxu0 0
  %74 = vmatpush1.bf16.msra.mxu0 0
  %75 = vmatprep.mubr.bf16.mxu0 0
  %76 = vmatmul.mubr.bf16.gmra.mrb[0].mxu0 %v41
  %v77 = vpop.f32.mrb[0].mxu0
  %v78 = vadd.f32 %v25, %v77
  %v79 = vpop.f32.mrb[0].mxu0
  %v80 = vpop.f32.mrb[0].mxu0
  %v81 = vpop.f32.mrb[0].mxu0
  %82 = vdwg.mxu0
  %v83 = vpack.c.bf16 %v78, %v78
  %84 = vst [vmem:[%s3] sm:$0xf] %v83
  // Predicated region
  $region14: #{forward.3} parent=0 // pred_check
    _
  $region15: #{forward.3} parent=0 // pred_check_branch
    %86 = sbr.rel (0) target = $region17
  $region16: #{forward.3} parent=0 // pred_region
    _
  $region17: #{forward.3} parent=0 // pred_fallthru
    _
  // Predicated region
  $region18: #{forward.3} parent=0 // pred_check
    _
  $region19: #{forward.3} parent=0 // pred_check_branch
    %88 = sbr.rel (0) target = $region21
  $region20: #{forward.3} parent=0 // pred_region
    _
  $region21: #{forward.3} parent=0 // pred_fallthru
    _

// kernel: forward.2
$region0: #{forward.2}
  #allocation0 [shape = 'u32[]', space=smem, size = 0x4, offset = 0x4, fixed_abs, tag = 'smem constant byte address 0x4 - core index']
  #allocation1 [shape = 'u32[144,128]{1,0:T(1,128)}', space=vmem, size = 0x12000, scoped, tag = 'internal scratch']
  %s0 = inlined_call_operand.vmem [shape: f32[8,96], index: 0, kind: input, shape index: {}]
  %s1 = inlined_call_operand.hbm [shape: f32[96,1920], index: 1, kind: input, shape index: {}]
  %s2 = inlined_call_operand.vmem [shape: f32[1,1920], index: 2, kind: input, shape index: {}]
  %s3 = inlined_call_operand.hbm [shape: f32[1920,32], index: 3, kind: input, shape index: {}]
  %s4 = inlined_call_operand.vmem [shape: f32[1,32], index: 4, kind: input, shape index: {}]
  %s5 = inlined_call_operand.vmem [shape: bf16[8,32], index: 5, kind: output, shape index: {}]
  %s6 = sld [smem:[#allocation0]]
  $region38: #{forward.2} parent=0
    _
  %s8 = ssub.s32 1, %s6
  %s9 = scalar_select 0, %s8, %s6
  $region1: #{forward.2} parent=0
    #allocation2 [shape = 'u8[737280]{0}', space=vmem, size = 0xb4000, scoped, tag = 'input window, operand 1, single buffered']
    #allocation3 [shape = 's32[1]{0}', space=sflag, size = 0x4, scoped, tag = 'scoped memory for forward.2']
    #allocation4 [shape = 'u8[983040]{0}', space=vmem, size = 0xf0000, scoped, tag = 'input window, operand 3, single buffered']
    #allocation5 [shape = 's32[1]{0}', space=sflag, size = 0x4, scoped, tag = 'scoped memory for forward.2']
    %10 = vsyncpa [#allocation3], 0
    %11 = vsyncpa [#allocation5], 0
    // Predicated region
    $region2: #{forward.2} parent=1 // pred_check
      _
    $region3: #{forward.2} parent=1 // pred_check_branch
      %13 = sbr.rel (0) target = $region5
    $region4: #{forward.2} parent=1 // pred_region
      _
    $region5: #{forward.2} parent=1 // pred_fallthru
      _
    // Predicated region
    $region6: #{forward.2} parent=1 // pred_check
      _
    $region7: #{forward.2} parent=1 // pred_check_branch
      %15 = sbr.rel (0) target = $region9
    $region8: #{forward.2} parent=1 // pred_region
      %s17 = ssub.s32 23040, 23040
      %18 = vsyncadd [#allocation3], %s17
      %s19 = sshll.u32 [#allocation2], 4
      %s20 = int_to_ptr.vmem [resolvable:$true] %s19
      %25 = dma.hbm_to_vmem [thread:$0]  %s1, 23040, %s20, [#allocation3], 1920, 1920, 120
    $region9: #{forward.2} parent=1 // pred_fallthru
      _
    // Predicated region
    $region10: #{forward.2} parent=1 // pred_check
      _
    $region11: #{forward.2} parent=1 // pred_check_branch
      %27 = sbr.rel (0) target = $region13
    $region12: #{forward.2} parent=1 // pred_region
      _
    $region13: #{forward.2} parent=1 // pred_fallthru
      _
    // Predicated region
    $region14: #{forward.2} parent=1 // pred_check
      _
    $region15: #{forward.2} parent=1 // pred_check_branch
      %29 = sbr.rel (0) target = $region17
    $region16: #{forward.2} parent=1 // pred_region
      %s31 = ssub.s32 30720, 30720
      %32 = vsyncadd [#allocation5], %s31
      %s33 = sshll.u32 [#allocation4], 4
      %s34 = int_to_ptr.vmem [resolvable:$true] %s33
      %39 = dma.hbm_to_vmem [thread:$0]  %s3, 30720, %s34, [#allocation5], 128, 128, 8
    $region17: #{forward.2} parent=1 // pred_fallthru
      _
    // Predicated region
    $region18: #{forward.2} parent=1 // pred_check
      _
    $region19: #{forward.2} parent=1 // pred_check_branch
      %41 = sbr.rel (0) target = $region21
    $region20: #{forward.2} parent=1 // pred_region
      _
    $region21: #{forward.2} parent=1 // pred_fallthru
      _
    // Predicated region
    $region22: #{forward.2} parent=1 // pred_check
      _
    $region23: #{forward.2} parent=1 // pred_check_branch
      %43 = sbr.rel (0) target = $region25
    $region24: #{forward.2} parent=1 // pred_region
      %44 = dma.done [#allocation3], 23040
    $region25: #{forward.2} parent=1 // pred_fallthru
      _
    // Predicated region
    $region26: #{forward.2} parent=1 // pred_check
      _
    $region27: #{forward.2} parent=1 // pred_check_branch
      %46 = sbr.rel (0) target = $region29
    $region28: #{forward.2} parent=1 // pred_region
      %47 = dma.done [#allocation5], 30720
    $region29: #{forward.2} parent=1 // pred_fallthru
      _
    %v48 = vld [vmem:[%s0] sm:$0xff]
    %v49 = vld [vmem:[#allocation2] sm:$0xff]
    %v50 = vld [vmem:[#allocation2 + $0x8] sm:$0xff]
    %v51 = vld [vmem:[#allocation2 + $0x10] sm:$0xff]
    %v52 = vld [vmem:[#allocation2 + $0x18] sm:$0xff]
    %v53 = vld [vmem:[#allocation2 + $0x20] sm:$0xff]
    %v54 = vld [vmem:[#allocation2 + $0x28] sm:$0xff]
    %v55 = vld [vmem:[#allocation2 + $0x30] sm:$0xff]
    %v56 = vld [vmem:[#allocation2 + $0x38] sm:$0xff]
    %v57 = vld [vmem:[#allocation2 + $0x40] sm:$0xff]
    %v58 = vld [vmem:[#allocation2 + $0x48] sm:$0xff]
    %v59 = vld [vmem:[#allocation2 + $0x50] sm:$0xff]
    %v60 = vld [vmem:[#allocation2 + $0x58] sm:$0xff]
    %v61 = vld [vmem:[#allocation2 + $0x60] sm:$0xff]
    %v62 = vld [vmem:[#allocation2 + $0x68] sm:$0xff]
    %v63 = vld [vmem:[#allocation2 + $0x70] sm:$0xff]
    %v64 = vld [vmem:[#allocation2 + $0x78] sm:$0xff]
    %v65 = vld [vmem:[#allocation2 + $0x80] sm:$0xff]
    %v66 = vld [vmem:[#allocation2 + $0x88] sm:$0xff]
    %v67 = vld [vmem:[#allocation2 + $0x90] sm:$0xff]
    %v68 = vld [vmem:[#allocation2 + $0x98] sm:$0xff]
    %v69 = vld [vmem:[#allocation2 + $0xa0] sm:$0xff]
    %v70 = vld [vmem:[#allocation2 + $0xa8] sm:$0xff]
    %v71 = vld [vmem:[#allocation2 + $0xb0] sm:$0xff]
    %v72 = vld [vmem:[#allocation2 + $0xb8] sm:$0xff]
    %v73 = vld [vmem:[#allocation2 + $0xc0] sm:$0xff]
    %v74 = vld [vmem:[#allocation2 + $0xc8] sm:$0xff]
    %v75 = vld [vmem:[#allocation2 + $0xd0] sm:$0xff]
    %v76 = vld [vmem:[#allocation2 + $0xd8] sm:$0xff]
    %v77 = vld [vmem:[#allocation2 + $0xe0] sm:$0xff]
    %v78 = vld [vmem:[#allocation2 + $0xe8] sm:$0xff]
    %v79 = vld [vmem:[#allocation2 + $0xf0] sm:$0xff]
    %v80 = vld [vmem:[#allocation2 + $0xf8] sm:$0xff]
    %v81 = vld [vmem:[#allocation2 + $0x100] sm:$0xff]
    %v82 = vld [vmem:[#allocation2 + $0x108] sm:$0xff]
    %v83 = vld [vmem:[#allocation2 + $0x110] sm:$0xff]
    %v84 = vld [vmem:[#allocation2 + $0x118] sm:$0xff]
    %v85 = vld [vmem:[#allocation2 + $0x120] sm:$0xff]
    %v86 = vld [vmem:[#allocation2 + $0x128] sm:$0xff]
    %v87 = vld [vmem:[#allocation2 + $0x130] sm:$0xff]
    %v88 = vld [vmem:[#allocation2 + $0x138] sm:$0xff]
    %v89 = vld [vmem:[#allocation2 + $0x140] sm:$0xff]
    %v90 = vld [vmem:[#allocation2 + $0x148] sm:$0xff]
    %v91 = vld [vmem:[#allocation2 + $0x150] sm:$0xff]
    %v92 = vld [vmem:[#allocation2 + $0x158] sm:$0xff]
    %v93 = vld [vmem:[#allocation2 + $0x160] sm:$0xff]
    %v94 = vld [vmem:[#allocation2 + $0x168] sm:$0xff]
    %v95 = vld [vmem:[#allocation2 + $0x170] sm:$0xff]
    %v96 = vld [vmem:[#allocation2 + $0x178] sm:$0xff]
    %v97 = vld [vmem:[#allocation2 + $0x180] sm:$0xff]
    %v98 = vld [vmem:[#allocation2 + $0x188] sm:$0xff]
    %v99 = vld [vmem:[#allocation2 + $0x190] sm:$0xff]
    %v100 = vld [vmem:[#allocation2 + $0x198] sm:$0xff]
    %v101 = vld [vmem:[#allocation2 + $0x1a0] sm:$0xff]
    %v102 = vld [vmem:[#allocation2 + $0x1a8] sm:$0xff]
    %v103 = vld [vmem:[#allocation2 + $0x1b0] sm:$0xff]
    %v104 = vld [vmem:[#allocation2 + $0x1b8] sm:$0xff]
    %v105 = vld [vmem:[#allocation2 + $0x1c0] sm:$0xff]
    %v106 = vld [vmem:[#allocation2 + $0x1c8] sm:$0xff]
    %v107 = vld [vmem:[#allocation2 + $0x1d0] sm:$0xff]
    %v108 = vld [vmem:[#allocation2 + $0x1d8] sm:$0xff]
    %v109 = vld [vmem:[#allocation2 + $0x1e0] sm:$0xff]
    %v110 = vld [vmem:[#allocation2 + $0x1e8] sm:$0xff]
    %v111 = vld [vmem:[#allocation2 + $0x1f0] sm:$0xff]
    %v112 = vld [vmem:[#allocation2 + $0x1f8] sm:$0xff]
    %v113 = vld [vmem:[#allocation2 + $0x200] sm:$0xff]
    %v114 = vld [vmem:[#allocation2 + $0x208] sm:$0xff]
    %v115 = vld [vmem:[#allocation2 + $0x210] sm:$0xff]
    %v116 = vld [vmem:[#allocation2 + $0x218] sm:$0xff]
    %v117 = vld [vmem:[#allocation2 + $0x220] sm:$0xff]
    %v118 = vld [vmem:[#allocation2 + $0x228] sm:$0xff]
    %v119 = vld [vmem:[#allocation2 + $0x230] sm:$0xff]
    %v120 = vld [vmem:[#allocation2 + $0x238] sm:$0xff]
    %v121 = vld [vmem:[#allocation2 + $0x240] sm:$0xff]
    %v122 = vld [vmem:[#allocation2 + $0x248] sm:$0xff]
    %v123 = vld [vmem:[#allocation2 + $0x250] sm:$0xff]
    %v124 = vld [vmem:[#allocation2 + $0x258] sm:$0xff]
    %v125 = vld [vmem:[#allocation2 + $0x260] sm:$0xff]
    %v126 = vld [vmem:[#allocation2 + $0x268] sm:$0xff]
    %v127 = vld [vmem:[#allocation2 + $0x270] sm:$0xff]
    %v128 = vld [vmem:[#allocation2 + $0x278] sm:$0xff]
    %v129 = vld [vmem:[#allocation2 + $0x280] sm:$0xff]
    %v130 = vld [vmem:[#allocation2 + $0x288] sm:$0xff]
    %v131 = vld [vmem:[#allocation2 + $0x290] sm:$0xff]
    %v132 = vld [vmem:[#allocation2 + $0x298] sm:$0xff]
    %v133 = vld [vmem:[#allocation2 + $0x2a0] sm:$0xff]
    %v134 = vld [vmem:[#allocation2 + $0x2a8] sm:$0xff]
    %v135 = vld [vmem:[#allocation2 + $0x2b0] sm:$0xff]
    %v136 = vld [vmem:[#allocation2 + $0x2b8] sm:$0xff]
    %v137 = vld [vmem:[#allocation2 + $0x2c0] sm:$0xff]
    %v138 = vld [vmem:[#allocation2 + $0x2c8] sm:$0xff]
    %v139 = vld [vmem:[#allocation2 + $0x2d0] sm:$0xff]
    %v140 = vld [vmem:[#allocation2 + $0x2d8] sm:$0xff]
    %v141 = vld [vmem:[#allocation2 + $0x2e0] sm:$0xff]
    %v142 = vld [vmem:[#allocation2 + $0x2e8] sm:$0xff]
    %v143 = vld [vmem:[#allocation2 + $0x2f0] sm:$0xff]
    %v144 = vld [vmem:[#allocation2 + $0x2f8] sm:$0xff]
    %v145 = vld [vmem:[#allocation2 + $0x300] sm:$0xff]
    %v146 = vld [vmem:[#allocation2 + $0x308] sm:$0xff]
    %v147 = vld [vmem:[#allocation2 + $0x310] sm:$0xff]
    %v148 = vld [vmem:[#allocation2 + $0x318] sm:$0xff]
    %v149 = vld [vmem:[#allocation2 + $0x320] sm:$0xff]
    %v150 = vld [vmem:[#allocation2 + $0x328] sm:$0xff]
    %v151 = vld [vmem:[#allocation2 + $0x330] sm:$0xff]
    %v152 = vld [vmem:[#allocation2 + $0x338] sm:$0xff]
    %v153 = vld [vmem:[#allocation2 + $0x340] sm:$0xff]
    %v154 = vld [vmem:[#allocation2 + $0x348] sm:$0xff]
    %v155 = vld [vmem:[#allocation2 + $0x350] sm:$0xff]
    %v156 = vld [vmem:[#allocation2 + $0x358] sm:$0xff]
    %v157 = vld [vmem:[#allocation2 + $0x360] sm:$0xff]
    %v158 = vld [vmem:[#allocation2 + $0x368] sm:$0xff]
    %v159 = vld [vmem:[#allocation2 + $0x370] sm:$0xff]
    %v160 = vld [vmem:[#allocation2 + $0x378] sm:$0xff]
    %v161 = vld [vmem:[#allocation2 + $0x380] sm:$0xff]
    %v162 = vld [vmem:[#allocation2 + $0x388] sm:$0xff]
    %v163 = vld [vmem:[#allocation2 + $0x390] sm:$0xff]
    %v164 = vld [vmem:[#allocation2 + $0x398] sm:$0xff]
    %v165 = vld [vmem:[#allocation2 + $0x3a0] sm:$0xff]
    %v166 = vld [vmem:[#allocation2 + $0x3a8] sm:$0xff]
    %v167 = vld [vmem:[#allocation2 + $0x3b0] sm:$0xff]
    %v168 = vld [vmem:[#allocation2 + $0x3b8] sm:$0xff]
    %v169 = vld [vmem:[#allocation2 + $0x3c0] sm:$0xff]
    %v170 = vld [vmem:[#allocation2 + $0x3c8] sm:$0xff]
    %v171 = vld [vmem:[#allocation2 + $0x3d0] sm:$0xff]
    %v172 = vld [vmem:[#allocation2 + $0x3d8] sm:$0xff]
    %v173 = vld [vmem:[#allocation2 + $0x3e0] sm:$0xff]
    %v174 = vld [vmem:[#allocation2 + $0x3e8] sm:$0xff]
    %v175 = vld [vmem:[#allocation2 + $0x3f0] sm:$0xff]
    %v176 = vld [vmem:[#allocation2 + $0x3f8] sm:$0xff]
    %v177 = vld [vmem:[#allocation2 + $0x400] sm:$0xff]
    %v178 = vld [vmem:[#allocation2 + $0x408] sm:$0xff]
    %v179 = vld [vmem:[#allocation2 + $0x410] sm:$0xff]
    %v180 = vld [vmem:[#allocation2 + $0x418] sm:$0xff]
    %v181 = vld [vmem:[#allocation2 + $0x420] sm:$0xff]
    %v182 = vld [vmem:[#allocation2 + $0x428] sm:$0xff]
    %v183 = vld [vmem:[#allocation2 + $0x430] sm:$0xff]
    %v184 = vld [vmem:[#allocation2 + $0x438] sm:$0xff]
    %v185 = vld [vmem:[#allocation2 + $0x440] sm:$0xff]
    %v186 = vld [vmem:[#allocation2 + $0x448] sm:$0xff]
    %v187 = vld [vmem:[#allocation2 + $0x450] sm:$0xff]
    %v188 = vld [vmem:[#allocation2 + $0x458] sm:$0xff]
    %v189 = vld [vmem:[#allocation2 + $0x460] sm:$0xff]
    %v190 = vld [vmem:[#allocation2 + $0x468] sm:$0xff]
    %v191 = vld [vmem:[#allocation2 + $0x470] sm:$0xff]
    %v192 = vld [vmem:[#allocation2 + $0x478] sm:$0xff]
    %v193 = vld [vmem:[#allocation2 + $0x480] sm:$0xff]
    %v194 = vld [vmem:[#allocation2 + $0x488] sm:$0xff]
    %v195 = vld [vmem:[#allocation2 + $0x490] sm:$0xff]
    %v196 = vld [vmem:[#allocation2 + $0x498] sm:$0xff]
    %v197 = vld [vmem:[#allocation2 + $0x4a0] sm:$0xff]
    %v198 = vld [vmem:[#allocation2 + $0x4a8] sm:$0xff]
    %v199 = vld [vmem:[#allocation2 + $0x4b0] sm:$0xff]
    %v200 = vld [vmem:[#allocation2 + $0x4b8] sm:$0xff]
    %v201 = vld [vmem:[#allocation2 + $0x4c0] sm:$0xff]
    %v202 = vld [vmem:[#allocation2 + $0x4c8] sm:$0xff]
    %v203 = vld [vmem:[#allocation2 + $0x4d0] sm:$0xff]
    %v204 = vld [vmem:[#allocation2 + $0x4d8] sm:$0xff]
    %v205 = vld [vmem:[#allocation2 + $0x4e0] sm:$0xff]
    %v206 = vld [vmem:[#allocation2 + $0x4e8] sm:$0xff]
    %v207 = vld [vmem:[#allocation2 + $0x4f0] sm:$0xff]
    %v208 = vld [vmem:[#allocation2 + $0x4f8] sm:$0xff]
    %v209 = vld [vmem:[#allocation2 + $0x500] sm:$0xff]
    %v210 = vld [vmem:[#allocation2 + $0x508] sm:$0xff]
    %v211 = vld [vmem:[#allocation2 + $0x510] sm:$0xff]
    %v212 = vld [vmem:[#allocation2 + $0x518] sm:$0xff]
    %v213 = vld [vmem:[#allocation2 + $0x520] sm:$0xff]
    %v214 = vld [vmem:[#allocation2 + $0x528] sm:$0xff]
    %v215 = vld [vmem:[#allocation2 + $0x530] sm:$0xff]
    %v216 = vld [vmem:[#allocation2 + $0x538] sm:$0xff]
    %v217 = vld [vmem:[#allocation2 + $0x540] sm:$0xff]
    %v218 = vld [vmem:[#allocation2 + $0x548] sm:$0xff]
    %v219 = vld [vmem:[#allocation2 + $0x550] sm:$0xff]
    %v220 = vld [vmem:[#allocation2 + $0x558] sm:$0xff]
    %v221 = vld [vmem:[#allocation2 + $0x560] sm:$0xff]
    %v222 = vld [vmem:[#allocation2 + $0x568] sm:$0xff]
    %v223 = vld [vmem:[#allocation2 + $0x570] sm:$0xff]
    %v224 = vld [vmem:[#allocation2 + $0x578] sm:$0xff]
    %v225 = vld [vmem:[#allocation2 + $0x580] sm:$0xff]
    %v226 = vld [vmem:[#allocation2 + $0x588] sm:$0xff]
    %v227 = vld [vmem:[#allocation2 + $0x590] sm:$0xff]
    %v228 = vld [vmem:[#allocation2 + $0x598] sm:$0xff]
    %v229 = vld [vmem:[%s2] sm:$0xff]
    %v230 = vld [vmem:[%s2 + $0x8] sm:$0xff]
    %v233 = vlaneseq
    %v234 = vshrl.u32 %v233, 7
    %v235 = vsub.s32 0, %v234
    %v236 = vrot.slane %v229, %v235
    %v237 = vlaneseq
    %v238 = vshrl.u32 %v237, 7
    %v239 = vsub.s32 1, %v238
    %v240 = vrot.slane %v229, %v239
    %v241 = vlaneseq
    %v242 = vshrl.u32 %v241, 7
    %v243 = vsub.s32 2, %v242
    %v244 = vrot.slane %v229, %v243
    %v245 = vlaneseq
    %v246 = vshrl.u32 %v245, 7
    %v247 = vsub.s32 3, %v246
    %v248 = vrot.slane %v229, %v247
    %v249 = vlaneseq
    %v250 = vshrl.u32 %v249, 7
    %v251 = vsub.s32 4, %v250
    %v252 = vrot.slane %v229, %v251
    %v253 = vlaneseq
    %v254 = vshrl.u32 %v253, 7
    %v255 = vsub.s32 5, %v254
    %v256 = vrot.slane %v229, %v255
    %v257 = vlaneseq
    %v258 = vshrl.u32 %v257, 7
    %v259 = vsub.s32 6, %v258
    %v260 = vrot.slane %v229, %v259
    %v261 = vlaneseq
    %v262 = vshrl.u32 %v261, 7
    %v263 = vsub.s32 7, %v262
    %v264 = vrot.slane %v229, %v263
    %v265 = vlaneseq
    %v266 = vshrl.u32 %v265, 7
    %v267 = vsub.s32 0, %v266
    %v268 = vrot.slane %v230, %v267
    %v269 = vlaneseq
    %v270 = vshrl.u32 %v269, 7
    %v271 = vsub.s32 1, %v270
    %v272 = vrot.slane %v230, %v271
    %v273 = vlaneseq
    %v274 = vshrl.u32 %v273, 7
    %v275 = vsub.s32 2, %v274
    %v276 = vrot.slane %v230, %v275
    %v277 = vlaneseq
    %v278 = vshrl.u32 %v277, 7
    %v279 = vsub.s32 3, %v278
    %v280 = vrot.slane %v230, %v279
    %v281 = vlaneseq
    %v282 = vshrl.u32 %v281, 7
    %v283 = vsub.s32 4, %v282
    %v284 = vrot.slane %v230, %v283
    %v285 = vlaneseq
    %v286 = vshrl.u32 %v285, 7
    %v287 = vsub.s32 5, %v286
    %v288 = vrot.slane %v230, %v287
    %v289 = vlaneseq
    %v290 = vshrl.u32 %v289, 7
    %v291 = vsub.s32 6, %v290
    %v292 = vrot.slane %v230, %v291
    %vm308 = vcmask 785408
    %v310 = vsel %vm308, %v48, 0
    %312 = vmatprep.subr.mxu0 %v50
    %313 = vmatpush1.msra.mxu0 %v49
    %314 = vmatprep.subr.mxu0 %v65
    %315 = vmatpush1.msra.mxu0 %v64
    %316 = vmatprep.subr.mxu0 %v80
    %317 = vmatpush1.msra.mxu0 %v79
    %318 = vmatprep.subr.mxu0 %v95
    %319 = vmatpush1.msra.mxu0 %v94
    %320 = vmatprep.subr.mxu0 %v110
    %321 = vmatpush1.msra.mxu0 %v109
    %322 = vmatprep.subr.mxu0 %v125
    %323 = vmatpush1.msra.mxu0 %v124
    %324 = vmatprep.subr.mxu0 %v140
    %325 = vmatpush1.msra.mxu0 %v139
    %326 = vmatprep.subr.mxu0 %v155
    %327 = vmatpush1.msra.mxu0 %v154
    %328 = vmatprep.subr.mxu0 %v170
    %329 = vmatpush1.msra.mxu0 %v169
    %330 = vmatprep.subr.mxu0 %v185
    %331 = vmatpush1.msra.mxu0 %v184
    %332 = vmatprep.subr.mxu0 %v200
    %333 = vmatpush1.msra.mxu0 %v199
    %334 = vmatprep.subr.mxu0 %v215
    %335 = vmatpush1.msra.mxu0 %v214
    %336 = vmatprep.subr.mxu0 0.0
    %337 = vmatpush1.msra.mxu0 0.0
    %338 = vmatprep.subr.mxu0 0.0
    %339 = vmatpush1.msra.mxu0 0.0
    %340 = vmatprep.subr.mxu0 0.0
    %341 = vmatpush1.msra.mxu0 0.0
    %342 = vmatprep.subr.mxu0 0.0
    %343 = vmatpush1.msra.mxu0 0.0
    %344 = vmatprep.subr.mxu0 0.0
    %345 = vmatpush1.msra.mxu0 0.0
    %346 = vmatprep.subr.mxu0 0.0
    %347 = vmatpush1.msra.mxu0 0.0
    %348 = vmatprep.subr.mxu0 0.0
    %349 = vmatpush1.msra.mxu0 0.0
    %350 = vmatprep.subr.mxu0 0.0
    %351 = vmatpush1.msra.mxu0 0.0
    %352 = vmatprep.subr.mxu0 0.0
    %353 = vmatpush1.msra.mxu0 0.0
    %354 = vmatprep.subr.mxu0 0.0
    %355 = vmatpush1.msra.mxu0 0.0
    %356 = vmatprep.subr.mxu0 0.0
    %357 = vmatpush1.msra.mxu0 0.0
    %358 = vmatprep.subr.mxu0 0.0
    %359 = vmatpush1.msra.mxu0 0.0
    %360 = vmatprep.subr.mxu0 0.0
    %361 = vmatpush1.msra.mxu0 0.0
    %362 = vmatprep.subr.mxu0 0.0
    %363 = vmatpush1.msra.mxu0 0.0
    %364 = vmatprep.subr.mxu0 0.0
    %365 = vmatpush1.msra.mxu0 0.0
    %366 = vmatprep.subr.mxu0 0.0
    %367 = vmatpush1.msra.mxu0 0.0
    %368 = vmatprep.subr.mxu0 0.0
    %369 = vmatpush1.msra.mxu0 0.0
    %370 = vmatprep.subr.mxu0 0.0
    %371 = vmatpush1.msra.mxu0 0.0
    %372 = vmatprep.subr.mxu0 0.0
    %373 = vmatpush1.msra.mxu0 0.0
    %374 = vmatprep.subr.mxu0 0.0
    %375 = vmatpush1.msra.mxu0 0.0
    %376 = vmatprep.mubr.f32.mxu0 0.0
    %377 = vmatmul.mubr.f32.gmra.mrb[0].mxu0 %v310
    %v378 = vpop.f32.mrb[0].mxu0
    %v379 = vadd.f32 %v236, %v378
    %v380 = vpop.f32.mrb[0].mxu0
    %v381 = vadd.f32 %v240, %v380
    %382 = vdwg.mxu0
    %383 = vmatprep.subr.mxu0 %v52
    %384 = vmatpush1.msra.mxu0 %v51
    %385 = vmatprep.subr.mxu0 %v67
    %386 = vmatpush1.msra.mxu0 %v66
    %387 = vmatprep.subr.mxu0 %v82
    %388 = vmatpush1.msra.mxu0 %v81
    %389 = vmatprep.subr.mxu0 %v97
    %390 = vmatpush1.msra.mxu0 %v96
    %391 = vmatprep.subr.mxu0 %v112
    %392 = vmatpush1.msra.mxu0 %v111
    %393 = vmatprep.subr.mxu0 %v127
    %394 = vmatpush1.msra.mxu0 %v126
    %395 = vmatprep.subr.mxu0 %v142
    %396 = vmatpush1.msra.mxu0 %v141
    %397 = vmatprep.subr.mxu0 %v157
    %398 = vmatpush1.msra.mxu0 %v156
    %399 = vmatprep.subr.mxu0 %v172
    %400 = vmatpush1.msra.mxu0 %v171
    %401 = vmatprep.subr.mxu0 %v187
    %402 = vmatpush1.msra.mxu0 %v186
    %403 = vmatprep.subr.mxu0 %v202
    %404 = vmatpush1.msra.mxu0 %v201
    %405 = vmatprep.subr.mxu0 %v217
    %406 = vmatpush1.msra.mxu0 %v216
    %407 = vmatprep.subr.mxu0 0.0
    %408 = vmatpush1.msra.mxu0 0.0
    %409 = vmatprep.subr.mxu0 0.0
    %410 = vmatpush1.msra.mxu0 0.0
    %411 = vmatprep.subr.mxu0 0.0
    %412 = vmatpush1.msra.mxu0 0.0
    %413 = vmatprep.subr.mxu0 0.0
    %414 = vmatpush1.msra.mxu0 0.0
    %415 = vmatprep.subr.mxu0 0.0
    %416 = vmatpush1.msra.mxu0 0.0
    %417 = vmatprep.subr.mxu0 0.0
    %418 = vmatpush1.msra.mxu0 0.0
    %419 = vmatprep.subr.mxu0 0.0
    %420 = vmatpush1.msra.mxu0 0.0
    %421 = vmatprep.subr.mxu0 0.0
    %422 = vmatpush1.msra.mxu0 0.0
    %423 = vmatprep.subr.mxu0 0.0
    %424 = vmatpush1.msra.mxu0 0.0
    %425 = vmatprep.subr.mxu0 0.0
    %426 = vmatpush1.msra.mxu0 0.0
    %427 = vmatprep.subr.mxu0 0.0
    %428 = vmatpush1.msra.mxu0 0.0
    %429 = vmatprep.subr.mxu0 0.0
    %430 = vmatpush1.msra.mxu0 0.0
    %431 = vmatprep.subr.mxu0 0.0
    %432 = vmatpush1.msra.mxu0 0.0
    %433 = vmatprep.subr.mxu0 0.0
    %434 = vmatpush1.msra.mxu0 0.0
    %435 = vmatprep.subr.mxu0 0.0
    %436 = vmatpush1.msra.mxu0 0.0
    %437 = vmatprep.subr.mxu0 0.0
    %438 = vmatpush1.msra.mxu0 0.0
    %439 = vmatprep.subr.mxu0 0.0
    %440 = vmatpush1.msra.mxu0 0.0
    %441 = vmatprep.subr.mxu0 0.0
    %442 = vmatpush1.msra.mxu0 0.0
    %443 = vmatprep.subr.mxu0 0.0
    %444 = vmatpush1.msra.mxu0 0.0
    %445 = vmatprep.subr.mxu0 0.0
    %446 = vmatpush1.msra.mxu0 0.0
    %447 = vmatprep.mubr.f32.mxu0 0.0
    %448 = vmatmul.mubr.f32.gmra.mrb[0].mxu0 %v310
    %v449 = vpop.f32.mrb[0].mxu0
    %v450 = vadd.f32 %v244, %v449
    %v451 = vpop.f32.mrb[0].mxu0
    %v452 = vadd.f32 %v248, %v451
    %453 = vdwg.mxu0
    %454 = vmatprep.subr.mxu0 %v54
    %455 = vmatpush1.msra.mxu0 %v53
    %456 = vmatprep.subr.mxu0 %v69
    %457 = vmatpush1.msra.mxu0 %v68
    %458 = vmatprep.subr.mxu0 %v84
    %459 = vmatpush1.msra.mxu0 %v83
    %460 = vmatprep.subr.mxu0 %v99
    %461 = vmatpush1.msra.mxu0 %v98
    %462 = vmatprep.subr.mxu0 %v114
    %463 = vmatpush1.msra.mxu0 %v113
    %464 = vmatprep.subr.mxu0 %v129
    %465 = vmatpush1.msra.mxu0 %v128
    %466 = vmatprep.subr.mxu0 %v144
    %467 = vmatpush1.msra.mxu0 %v143
    %468 = vmatprep.subr.mxu0 %v159
    %469 = vmatpush1.msra.mxu0 %v158
    %470 = vmatprep.subr.mxu0 %v174
    %471 = vmatpush1.msra.mxu0 %v173
    %472 = vmatprep.subr.mxu0 %v189
    %473 = vmatpush1.msra.mxu0 %v188
    %474 = vmatprep.subr.mxu0 %v204
    %475 = vmatpush1.msra.mxu0 %v203
    %476 = vmatprep.subr.mxu0 %v219
    %477 = vmatpush1.msra.mxu0 %v218
    %478 = vmatprep.subr.mxu0 0.0
    %479 = vmatpush1.msra.mxu0 0.0
    %480 = vmatprep.subr.mxu0 0.0
    %481 = vmatpush1.msra.mxu0 0.0
    %482 = vmatprep.subr.mxu0 0.0
    %483 = vmatpush1.msra.mxu0 0.0
    %484 = vmatprep.subr.mxu0 0.0
    %485 = vmatpush1.msra.mxu0 0.0
    %486 = vmatprep.subr.mxu0 0.0
    %487 = vmatpush1.msra.mxu0 0.0
    %488 = vmatprep.subr.mxu0 0.0
    %489 = vmatpush1.msra.mxu0 0.0
    %490 = vmatprep.subr.mxu0 0.0
    %491 = vmatpush1.msra.mxu0 0.0
    %492 = vmatprep.subr.mxu0 0.0
    %493 = vmatpush1.msra.mxu0 0.0
    %494 = vmatprep.subr.mxu0 0.0
    %495 = vmatpush1.msra.mxu0 0.0
    %496 = vmatprep.subr.mxu0 0.0
    %497 = vmatpush1.msra.mxu0 0.0
    %498 = vmatprep.subr.mxu0 0.0
    %499 = vmatpush1.msra.mxu0 0.0
    %500 = vmatprep.subr.mxu0 0.0
    %501 = vmatpush1.msra.mxu0 0.0
    %502 = vmatprep.subr.mxu0 0.0
    %503 = vmatpush1.msra.mxu0 0.0
    %504 = vmatprep.subr.mxu0 0.0
    %505 = vmatpush1.msra.mxu0 0.0
    %506 = vmatprep.subr.mxu0 0.0
    %507 = vmatpush1.msra.mxu0 0.0
    %508 = vmatprep.subr.mxu0 0.0
    %509 = vmatpush1.msra.mxu0 0.0
    %510 = vmatprep.subr.mxu0 0.0
    %511 = vmatpush1.msra.mxu0 0.0
    %512 = vmatprep.subr.mxu0 0.0
    %513 = vmatpush1.msra.mxu0 0.0
    %514 = vmatprep.subr.mxu0 0.0
    %515 = vmatpush1.msra.mxu0 0.0
    %516 = vmatprep.subr.mxu0 0.0
    %517 = vmatpush1.msra.mxu0 0.0
    %518 = vmatprep.mubr.f32.mxu0 0.0
    %519 = vmatmul.mubr.f32.gmra.mrb[0].mxu0 %v310
    %v520 = vpop.f32.mrb[0].mxu0
    %v521 = vadd.f32 %v252, %v520
    %v522 = vpop.f32.mrb[0].mxu0
    %v523 = vadd.f32 %v256, %v522
    %524 = vdwg.mxu0
    %525 = vmatprep.subr.mxu0 %v56
    %526 = vmatpush1.msra.mxu0 %v55
    %527 = vmatprep.subr.mxu0 %v71
    %528 = vmatpush1.msra.mxu0 %v70
    %529 = vmatprep.subr.mxu0 %v86
    %530 = vmatpush1.msra.mxu0 %v85
    %531 = vmatprep.subr.mxu0 %v101
    %532 = vmatpush1.msra.mxu0 %v100
    %533 = vmatprep.subr.mxu0 %v116
    %534 = vmatpush1.msra.mxu0 %v115
    %535 = vmatprep.subr.mxu0 %v131
    %536 = vmatpush1.msra.mxu0 %v130
    %537 = vmatprep.subr.mxu0 %v146
    %538 = vmatpush1.msra.mxu0 %v145
    %539 = vmatprep.subr.mxu0 %v161
    %540 = vmatpush1.msra.mxu0 %v160
    %541 = vmatprep.subr.mxu0 %v176
    %542 = vmatpush1.msra.mxu0 %v175
    %543 = vmatprep.subr.mxu0 %v191
    %544 = vmatpush1.msra.mxu0 %v190
    %545 = vmatprep.subr.mxu0 %v206
    %546 = vmatpush1.msra.mxu0 %v205
    %547 = vmatprep.subr.mxu0 %v221
    %548 = vmatpush1.msra.mxu0 %v220
    %549 = vmatprep.subr.mxu0 0.0
    %550 = vmatpush1.msra.mxu0 0.0
    %551 = vmatprep.subr.mxu0 0.0
    %552 = vmatpush1.msra.mxu0 0.0
    %553 = vmatprep.subr.mxu0 0.0
    %554 = vmatpush1.msra.mxu0 0.0
    %555 = vmatprep.subr.mxu0 0.0
    %556 = vmatpush1.msra.mxu0 0.0
    %557 = vmatprep.subr.mxu0 0.0
    %558 = vmatpush1.msra.mxu0 0.0
    %559 = vmatprep.subr.mxu0 0.0
    %560 = vmatpush1.msra.mxu0 0.0
    %561 = vmatprep.subr.mxu0 0.0
    %562 = vmatpush1.msra.mxu0 0.0
    %563 = vmatprep.subr.mxu0 0.0
    %564 = vmatpush1.msra.mxu0 0.0
    %565 = vmatprep.subr.mxu0 0.0
    %566 = vmatpush1.msra.mxu0 0.0
    %567 = vmatprep.subr.mxu0 0.0
    %568 = vmatpush1.msra.mxu0 0.0
    %569 = vmatprep.subr.mxu0 0.0
    %570 = vmatpush1.msra.mxu0 0.0
    %571 = vmatprep.subr.mxu0 0.0
    %572 = vmatpush1.msra.mxu0 0.0
    %573 = vmatprep.subr.mxu0 0.0
    %574 = vmatpush1.msra.mxu0 0.0
    %575 = vmatprep.subr.mxu0 0.0
    %576 = vmatpush1.msra.mxu0 0.0
    %577 = vmatprep.subr.mxu0 0.0
    %578 = vmatpush1.msra.mxu0 0.0
    %579 = vmatprep.subr.mxu0 0.0
    %580 = vmatpush1.msra.mxu0 0.0
    %581 = vmatprep.subr.mxu0 0.0
    %582 = vmatpush1.msra.mxu0 0.0
    %583 = vmatprep.subr.mxu0 0.0
    %584 = vmatpush1.msra.mxu0 0.0
    %585 = vmatprep.subr.mxu0 0.0
    %586 = vmatpush1.msra.mxu0 0.0
    %587 = vmatprep.subr.mxu0 0.0
    %588 = vmatpush1.msra.mxu0 0.0
    %589 = vmatprep.mubr.f32.mxu0 0.0
    %590 = vmatmul.mubr.f32.gmra.mrb[0].mxu0 %v310
    %v591 = vpop.f32.mrb[0].mxu0
    %v592 = vadd.f32 %v260, %v591
    %v593 = vpop.f32.mrb[0].mxu0
    %v594 = vadd.f32 %v264, %v593
    %595 = vdwg.mxu0
    %596 = vmatprep.subr.mxu0 %v58
    %597 = vmatpush1.msra.mxu0 %v57
    %598 = vmatprep.subr.mxu0 %v73
    %599 = vmatpush1.msra.mxu0 %v72
    %600 = vmatprep.subr.mxu0 %v88
    %601 = vmatpush1.msra.mxu0 %v87
    %602 = vmatprep.subr.mxu0 %v103
    %603 = vmatpush1.msra.mxu0 %v102
    %604 = vmatprep.subr.mxu0 %v118
    %605 = vmatpush1.msra.mxu0 %v117
    %606 = vmatprep.subr.mxu0 %v133
    %607 = vmatpush1.msra.mxu0 %v132
    %608 = vmatprep.subr.mxu0 %v148
    %609 = vmatpush1.msra.mxu0 %v147
    %610 = vmatprep.subr.mxu0 %v163
    %611 = vmatpush1.msra.mxu0 %v162
    %612 = vmatprep.subr.mxu0 %v178
    %613 = vmatpush1.msra.mxu0 %v177
    %614 = vmatprep.subr.mxu0 %v193
    %615 = vmatpush1.msra.mxu0 %v192
    %616 = vmatprep.subr.mxu0 %v208
    %617 = vmatpush1.msra.mxu0 %v207
    %618 = vmatprep.subr.mxu0 %v223
    %619 = vmatpush1.msra.mxu0 %v222
    %620 = vmatprep.subr.mxu0 0.0
    %621 = vmatpush1.msra.mxu0 0.0
    %622 = vmatprep.subr.mxu0 0.0
    %623 = vmatpush1.msra.mxu0 0.0
    %624 = vmatprep.subr.mxu0 0.0
    %625 = vmatpush1.msra.mxu0 0.0
    %626 = vmatprep.subr.mxu0 0.0
    %627 = vmatpush1.msra.mxu0 0.0
    %628 = vmatprep.subr.mxu0 0.0
    %629 = vmatpush1.msra.mxu0 0.0
    %630 = vmatprep.subr.mxu0 0.0
    %631 = vmatpush1.msra.mxu0 0.0
    %632 = vmatprep.subr.mxu0 0.0
    %633 = vmatpush1.msra.mxu0 0.0
    %634 = vmatprep.subr.mxu0 0.0
    %635 = vmatpush1.msra.mxu0 0.0
    %636 = vmatprep.subr.mxu0 0.0
    %637 = vmatpush1.msra.mxu0 0.0
    %638 = vmatprep.subr.mxu0 0.0
    %639 = vmatpush1.msra.mxu0 0.0
    %640 = vmatprep.subr.mxu0 0.0
    %641 = vmatpush1.msra.mxu0 0.0
    %642 = vmatprep.subr.mxu0 0.0
    %643 = vmatpush1.msra.mxu0 0.0
    %644 = vmatprep.subr.mxu0 0.0
    %645 = vmatpush1.msra.mxu0 0.0
    %646 = vmatprep.subr.mxu0 0.0
    %647 = vmatpush1.msra.mxu0 0.0
    %648 = vmatprep.subr.mxu0 0.0
    %649 = vmatpush1.msra.mxu0 0.0
    %650 = vmatprep.subr.mxu0 0.0
    %651 = vmatpush1.msra.mxu0 0.0
    %652 = vmatprep.subr.mxu0 0.0
    %653 = vmatpush1.msra.mxu0 0.0
    %654 = vmatprep.subr.mxu0 0.0
    %655 = vmatpush1.msra.mxu0 0.0
    %656 = vmatprep.subr.mxu0 0.0
    %657 = vmatpush1.msra.mxu0 0.0
    %658 = vmatprep.subr.mxu0 0.0
    %659 = vmatpush1.msra.mxu0 0.0
    %660 = vmatprep.mubr.f32.mxu0 0.0
    %661 = vmatmul.mubr.f32.gmra.mrb[0].mxu0 %v310
    %v662 = vpop.f32.mrb[0].mxu0
    %v663 = vadd.f32 %v268, %v662
    %v664 = vpop.f32.mrb[0].mxu0
    %v665 = vadd.f32 %v272, %v664
    %666 = vdwg.mxu0
    %667 = vmatprep.subr.mxu0 %v60
    %668 = vmatpush1.msra.mxu0 %v59
    %669 = vmatprep.subr.mxu0 %v75
    %670 = vmatpush1.msra.mxu0 %v74
    %671 = vmatprep.subr.mxu0 %v90
    %672 = vmatpush1.msra.mxu0 %v89
    %673 = vmatprep.subr.mxu0 %v105
    %674 = vmatpush1.msra.mxu0 %v104
    %675 = vmatprep.subr.mxu0 %v120
    %676 = vmatpush1.msra.mxu0 %v119
    %677 = vmatprep.subr.mxu0 %v135
    %678 = vmatpush1.msra.mxu0 %v134
    %679 = vmatprep.subr.mxu0 %v150
    %680 = vmatpush1.msra.mxu0 %v149
    %681 = vmatprep.subr.mxu0 %v165
    %682 = vmatpush1.msra.mxu0 %v164
    %683 = vmatprep.subr.mxu0 %v180
    %684 = vmatpush1.msra.mxu0 %v179
    %685 = vmatprep.subr.mxu0 %v195
    %686 = vmatpush1.msra.mxu0 %v194
    %687 = vmatprep.subr.mxu0 %v210
    %688 = vmatpush1.msra.mxu0 %v209
    %689 = vmatprep.subr.mxu0 %v225
    %690 = vmatpush1.msra.mxu0 %v224
    %691 = vmatprep.subr.mxu0 0.0
    %692 = vmatpush1.msra.mxu0 0.0
    %693 = vmatprep.subr.mxu0 0.0
    %694 = vmatpush1.msra.mxu0 0.0
    %695 = vmatprep.subr.mxu0 0.0
    %696 = vmatpush1.msra.mxu0 0.0
    %697 = vmatprep.subr.mxu0 0.0
    %698 = vmatpush1.msra.mxu0 0.0
    %699 = vmatprep.subr.mxu0 0.0
    %700 = vmatpush1.msra.mxu0 0.0
    %701 = vmatprep.subr.mxu0 0.0
    %702 = vmatpush1.msra.mxu0 0.0
    %703 = vmatprep.subr.mxu0 0.0
    %704 = vmatpush1.msra.mxu0 0.0
    %705 = vmatprep.subr.mxu0 0.0
    %706 = vmatpush1.msra.mxu0 0.0
    %707 = vmatprep.subr.mxu0 0.0
    %708 = vmatpush1.msra.mxu0 0.0
    %709 = vmatprep.subr.mxu0 0.0
    %710 = vmatpush1.msra.mxu0 0.0
    %711 = vmatprep.subr.mxu0 0.0
    %712 = vmatpush1.msra.mxu0 0.0
    %713 = vmatprep.subr.mxu0 0.0
    %714 = vmatpush1.msra.mxu0 0.0
    %715 = vmatprep.subr.mxu0 0.0
    %716 = vmatpush1.msra.mxu0 0.0
    %717 = vmatprep.subr.mxu0 0.0
    %718 = vmatpush1.msra.mxu0 0.0
    %719 = vmatprep.subr.mxu0 0.0
    %720 = vmatpush1.msra.mxu0 0.0
    %721 = vmatprep.subr.mxu0 0.0
    %722 = vmatpush1.msra.mxu0 0.0
    %723 = vmatprep.subr.mxu0 0.0
    %724 = vmatpush1.msra.mxu0 0.0
    %725 = vmatprep.subr.mxu0 0.0
    %726 = vmatpush1.msra.mxu0 0.0
    %727 = vmatprep.subr.mxu0 0.0
    %728 = vmatpush1.msra.mxu0 0.0
    %729 = vmatprep.subr.mxu0 0.0
    %730 = vmatpush1.msra.mxu0 0.0
    %731 = vmatprep.mubr.f32.mxu0 0.0
    %732 = vmatmul.mubr.f32.gmra.mrb[0].mxu0 %v310
    %v733 = vpop.f32.mrb[0].mxu0
    %v734 = vadd.f32 %v276, %v733
    %v735 = vpop.f32.mrb[0].mxu0
    %v736 = vadd.f32 %v280, %v735
    %737 = vdwg.mxu0
    %738 = vmatprep.subr.mxu0 %v62
    %739 = vmatpush1.msra.mxu0 %v61
    %740 = vmatprep.subr.mxu0 %v77
    %741 = vmatpush1.msra.mxu0 %v76
    %742 = vmatprep.subr.mxu0 %v92
    %743 = vmatpush1.msra.mxu0 %v91
    %744 = vmatprep.subr.mxu0 %v107
    %745 = vmatpush1.msra.mxu0 %v106
    %746 = vmatprep.subr.mxu0 %v122
    %747 = vmatpush1.msra.mxu0 %v121
    %748 = vmatprep.subr.mxu0 %v137
    %749 = vmatpush1.msra.mxu0 %v136
    %750 = vmatprep.subr.mxu0 %v152
    %751 = vmatpush1.msra.mxu0 %v151
    %752 = vmatprep.subr.mxu0 %v167
    %753 = vmatpush1.msra.mxu0 %v166
    %754 = vmatprep.subr.mxu0 %v182
    %755 = vmatpush1.msra.mxu0 %v181
    %756 = vmatprep.subr.mxu0 %v197
    %757 = vmatpush1.msra.mxu0 %v196
    %758 = vmatprep.subr.mxu0 %v212
    %759 = vmatpush1.msra.mxu0 %v211
    %760 = vmatprep.subr.mxu0 %v227
    %761 = vmatpush1.msra.mxu0 %v226
    %762 = vmatprep.subr.mxu0 0.0
    %763 = vmatpush1.msra.mxu0 0.0
    %764 = vmatprep.subr.mxu0 0.0
    %765 = vmatpush1.msra.mxu0 0.0
    %766 = vmatprep.subr.mxu0 0.0
    %767 = vmatpush1.msra.mxu0 0.0
    %768 = vmatprep.subr.mxu0 0.0
    %769 = vmatpush1.msra.mxu0 0.0
    %770 = vmatprep.subr.mxu0 0.0
    %771 = vmatpush1.msra.mxu0 0.0
    %772 = vmatprep.subr.mxu0 0.0
    %773 = vmatpush1.msra.mxu0 0.0
    %774 = vmatprep.subr.mxu0 0.0
    %775 = vmatpush1.msra.mxu0 0.0
    %776 = vmatprep.subr.mxu0 0.0
    %777 = vmatpush1.msra.mxu0 0.0
    %778 = vmatprep.subr.mxu0 0.0
    %779 = vmatpush1.msra.mxu0 0.0
    %780 = vmatprep.subr.mxu0 0.0
    %781 = vmatpush1.msra.mxu0 0.0
    %782 = vmatprep.subr.mxu0 0.0
    %783 = vmatpush1.msra.mxu0 0.0
    %784 = vmatprep.subr.mxu0 0.0
    %785 = vmatpush1.msra.mxu0 0.0
    %786 = vmatprep.subr.mxu0 0.0
    %787 = vmatpush1.msra.mxu0 0.0
    %788 = vmatprep.subr.mxu0 0.0
    %789 = vmatpush1.msra.mxu0 0.0
    %790 = vmatprep.subr.mxu0 0.0
    %791 = vmatpush1.msra.mxu0 0.0
    %792 = vmatprep.subr.mxu0 0.0
    %793 = vmatpush1.msra.mxu0 0.0
    %794 = vmatprep.subr.mxu0 0.0
    %795 = vmatpush1.msra.mxu0 0.0
    %796 = vmatprep.subr.mxu0 0.0
    %797 = vmatpush1.msra.mxu0 0.0
    %798 = vmatprep.subr.mxu0 0.0
    %799 = vmatpush1.msra.mxu0 0.0
    %800 = vmatprep.subr.mxu0 0.0
    %801 = vmatpush1.msra.mxu0 0.0
    %802 = vmatprep.mubr.f32.mxu0 0.0
    %803 = vmatmul.mubr.f32.gmra.mrb[0].mxu0 %v310
    %v804 = vpop.f32.mrb[0].mxu0
    %v805 = vadd.f32 %v284, %v804
    %v806 = vpop.f32.mrb[0].mxu0
    %v807 = vadd.f32 %v288, %v806
    %808 = vdwg.mxu0
    %809 = vmatprep.subr.mxu0 0.0
    %810 = vmatpush1.msra.mxu0 %v63
    %811 = vmatprep.subr.mxu0 0.0
    %812 = vmatpush1.msra.mxu0 %v78
    %813 = vmatprep.subr.mxu0 0.0
    %814 = vmatpush1.msra.mxu0 %v93
    %815 = vmatprep.subr.mxu0 0.0
    %816 = vmatpush1.msra.mxu0 %v108
    %817 = vmatprep.subr.mxu0 0.0
    %818 = vmatpush1.msra.mxu0 %v123
    %819 = vmatprep.subr.mxu0 0.0
    %820 = vmatpush1.msra.mxu0 %v138
    %821 = vmatprep.subr.mxu0 0.0
    %822 = vmatpush1.msra.mxu0 %v153
    %823 = vmatprep.subr.mxu0 0.0
    %824 = vmatpush1.msra.mxu0 %v168
    %825 = vmatprep.subr.mxu0 0.0
    %826 = vmatpush1.msra.mxu0 %v183
    %827 = vmatprep.subr.mxu0 0.0
    %828 = vmatpush1.msra.mxu0 %v198
    %829 = vmatprep.subr.mxu0 0.0
    %830 = vmatpush1.msra.mxu0 %v213
    %831 = vmatprep.subr.mxu0 0.0
    %832 = vmatpush1.msra.mxu0 %v228
    %833 = vmatprep.subr.mxu0 0.0
    %834 = vmatpush1.msra.mxu0 0.0
    %835 = vmatprep.subr.mxu0 0.0
    %836 = vmatpush1.msra.mxu0 0.0
    %837 = vmatprep.subr.mxu0 0.0
    %838 = vmatpush1.msra.mxu0 0.0
    %839 = vmatprep.subr.mxu0 0.0
    %840 = vmatpush1.msra.mxu0 0.0
    %841 = vmatprep.subr.mxu0 0.0
    %842 = vmatpush1.msra.mxu0 0.0
    %843 = vmatprep.subr.mxu0 0.0
    %844 = vmatpush1.msra.mxu0 0.0
    %845 = vmatprep.subr.mxu0 0.0
    %846 = vmatpush1.msra.mxu0 0.0
    %847 = vmatprep.subr.mxu0 0.0
    %848 = vmatpush1.msra.mxu0 0.0
    %849 = vmatprep.subr.mxu0 0.0
    %850 = vmatpush1.msra.mxu0 0.0
    %851 = vmatprep.subr.mxu0 0.0
    %852 = vmatpush1.msra.mxu0 0.0
    %853 = vmatprep.subr.mxu0 0.0
    %854 = vmatpush1.msra.mxu0 0.0
    %855 = vmatprep.subr.mxu0 0.0
    %856 = vmatpush1.msra.mxu0 0.0
    %857 = vmatprep.subr.mxu0 0.0
    %858 = vmatpush1.msra.mxu0 0.0
    %859 = vmatprep.subr.mxu0 0.0
    %860 = vmatpush1.msra.mxu0 0.0
    %861 = vmatprep.subr.mxu0 0.0
    %862 = vmatpush1.msra.mxu0 0.0
    %863 = vmatprep.subr.mxu0 0.0
    %864 = vmatpush1.msra.mxu0 0.0
    %865 = vmatprep.subr.mxu0 0.0
    %866 = vmatpush1.msra.mxu0 0.0
    %867 = vmatprep.subr.mxu0 0.0
    %868 = vmatpush1.msra.mxu0 0.0
    %869 = vmatprep.subr.mxu0 0.0
    %870 = vmatpush1.msra.mxu0 0.0
    %871 = vmatprep.subr.mxu0 0.0
    %872 = vmatpush1.msra.mxu0 0.0
    %873 = vmatprep.mubr.f32.mxu0 0.0
    %874 = vmatmul.mubr.f32.gmra.mrb[0].mxu0 %v310
    %v875 = vpop.f32.mrb[0].mxu0
    %v876 = vadd.f32 %v292, %v875
    %v877 = vpop.f32.mrb[0].mxu0
    %878 = vdwg.mxu0
    %v879 = vmax.f32 %v379, 0.0
    %v880 = vmax.f32 %v381, 0.0
    %v881 = vmax.f32 %v450, 0.0
    %v882 = vmax.f32 %v452, 0.0
    %v883 = vmax.f32 %v521, 0.0
    %v884 = vmax.f32 %v523, 0.0
    %v885 = vmax.f32 %v592, 0.0
    %v886 = vmax.f32 %v594, 0.0
    %v887 = vmax.f32 %v663, 0.0
    %v888 = vmax.f32 %v665, 0.0
    %v889 = vmax.f32 %v734, 0.0
    %v890 = vmax.f32 %v736, 0.0
    %v891 = vmax.f32 %v805, 0.0
    %v892 = vmax.f32 %v807, 0.0
    %v893 = vmax.f32 %v876, 0.0
    %v894 = vld [vmem:[#allocation4] sm:$0xff]
    %v895 = vld [vmem:[#allocation4 + $0x8] sm:$0xff]
    %v896 = vld [vmem:[#allocation4 + $0x10] sm:$0xff]
    %v897 = vld [vmem:[#allocation4 + $0x18] sm:$0xff]
    %v898 = vld [vmem:[#allocation4 + $0x20] sm:$0xff]
    %v899 = vld [vmem:[#allocation4 + $0x28] sm:$0xff]
    %v900 = vld [vmem:[#allocation4 + $0x30] sm:$0xff]
    %v901 = vld [vmem:[#allocation4 + $0x38] sm:$0xff]
    %v902 = vld [vmem:[#allocation4 + $0x40] sm:$0xff]
    %v903 = vld [vmem:[#allocation4 + $0x48] sm:$0xff]
    %v904 = vld [vmem:[#allocation4 + $0x50] sm:$0xff]
    %v905 = vld [vmem:[#allocation4 + $0x58] sm:$0xff]
    %v906 = vld [vmem:[#allocation4 + $0x60] sm:$0xff]
    %v907 = vld [vmem:[#allocation4 + $0x68] sm:$0xff]
    %v908 = vld [vmem:[#allocation4 + $0x70] sm:$0xff]
    %v909 = vld [vmem:[#allocation4 + $0x78] sm:$0xff]
    %v910 = vld [vmem:[#allocation4 + $0x80] sm:$0xff]
    %v911 = vld [vmem:[#allocation4 + $0x88] sm:$0xff]
    %v912 = vld [vmem:[#allocation4 + $0x90] sm:$0xff]
    %v913 = vld [vmem:[#allocation4 + $0x98] sm:$0xff]
    %v914 = vld [vmem:[#allocation4 + $0xa0] sm:$0xff]
    %v915 = vld [vmem:[#allocation4 + $0xa8] sm:$0xff]
    %v916 = vld [vmem:[#allocation4 + $0xb0] sm:$0xff]
    %v917 = vld [vmem:[#allocation4 + $0xb8] sm:$0xff]
    %v918 = vld [vmem:[#allocation4 + $0xc0] sm:$0xff]
    %v919 = vld [vmem:[#allocation4 + $0xc8] sm:$0xff]
    %v920 = vld [vmem:[#allocation4 + $0xd0] sm:$0xff]
    %v921 = vld [vmem:[#allocation4 + $0xd8] sm:$0xff]
    %v922 = vld [vmem:[#allocation4 + $0xe0] sm:$0xff]
    %v923 = vld [vmem:[#allocation4 + $0xe8] sm:$0xff]
    %v924 = vld [vmem:[#allocation4 + $0xf0] sm:$0xff]
    %v925 = vld [vmem:[#allocation4 + $0xf8] sm:$0xff]
    %v926 = vld [vmem:[#allocation4 + $0x100] sm:$0xff]
    %v927 = vld [vmem:[#allocation4 + $0x108] sm:$0xff]
    %v928 = vld [vmem:[#allocation4 + $0x110] sm:$0xff]
    %v929 = vld [vmem:[#allocation4 + $0x118] sm:$0xff]
    %v930 = vld [vmem:[#allocation4 + $0x120] sm:$0xff]
    %v931 = vld [vmem:[#allocation4 + $0x128] sm:$0xff]
    %v932 = vld [vmem:[#allocation4 + $0x130] sm:$0xff]
    %v933 = vld [vmem:[#allocation4 + $0x138] sm:$0xff]
    %v934 = vld [vmem:[#allocation4 + $0x140] sm:$0xff]
    %v935 = vld [vmem:[#allocation4 + $0x148] sm:$0xff]
    %v936 = vld [vmem:[#allocation4 + $0x150] sm:$0xff]
    %v937 = vld [vmem:[#allocation4 + $0x158] sm:$0xff]
    %v938 = vld [vmem:[#allocation4 + $0x160] sm:$0xff]
    %v939 = vld [vmem:[#allocation4 + $0x168] sm:$0xff]
    %v940 = vld [vmem:[#allocation4 + $0x170] sm:$0xff]
    %v941 = vld [vmem:[#allocation4 + $0x178] sm:$0xff]
    %v942 = vld [vmem:[#allocation4 + $0x180] sm:$0xff]
    %v943 = vld [vmem:[#allocation4 + $0x188] sm:$0xff]
    %v944 = vld [vmem:[#allocation4 + $0x190] sm:$0xff]
    %v945 = vld [vmem:[#allocation4 + $0x198] sm:$0xff]
    %v946 = vld [vmem:[#allocation4 + $0x1a0] sm:$0xff]
    %v947 = vld [vmem:[#allocation4 + $0x1a8] sm:$0xff]
    %v948 = vld [vmem:[#allocation4 + $0x1b0] sm:$0xff]
    %v949 = vld [vmem:[#allocation4 + $0x1b8] sm:$0xff]
    %v950 = vld [vmem:[#allocation4 + $0x1c0] sm:$0xff]
    %v951 = vld [vmem:[#allocation4 + $0x1c8] sm:$0xff]
    %v952 = vld [vmem:[#allocation4 + $0x1d0] sm:$0xff]
    %v953 = vld [vmem:[#allocation4 + $0x1d8] sm:$0xff]
    %v954 = vld [vmem:[#allocation4 + $0x1e0] sm:$0xff]
    %v955 = vld [vmem:[#allocation4 + $0x1e8] sm:$0xff]
    %v956 = vld [vmem:[#allocation4 + $0x1f0] sm:$0xff]
    %v957 = vld [vmem:[#allocation4 + $0x1f8] sm:$0xff]
    %v958 = vld [vmem:[#allocation4 + $0x200] sm:$0xff]
    %v959 = vld [vmem:[#allocation4 + $0x208] sm:$0xff]
    %v960 = vld [vmem:[#allocation4 + $0x210] sm:$0xff]
    %v961 = vld [vmem:[#allocation4 + $0x218] sm:$0xff]
    %v962 = vld [vmem:[#allocation4 + $0x220] sm:$0xff]
    %v963 = vld [vmem:[#allocation4 + $0x228] sm:$0xff]
    %v964 = vld [vmem:[#allocation4 + $0x230] sm:$0xff]
    %v965 = vld [vmem:[#allocation4 + $0x238] sm:$0xff]
    %v966 = vld [vmem:[#allocation4 + $0x240] sm:$0xff]
    %v967 = vld [vmem:[#allocation4 + $0x248] sm:$0xff]
    %v968 = vld [vmem:[#allocation4 + $0x250] sm:$0xff]
    %v969 = vld [vmem:[#allocation4 + $0x258] sm:$0xff]
    %v970 = vld [vmem:[#allocation4 + $0x260] sm:$0xff]
    %v971 = vld [vmem:[#allocation4 + $0x268] sm:$0xff]
    %v972 = vld [vmem:[#allocation4 + $0x270] sm:$0xff]
    %v973 = vld [vmem:[#allocation4 + $0x278] sm:$0xff]
    %v974 = vld [vmem:[#allocation4 + $0x280] sm:$0xff]
    %v975 = vld [vmem:[#allocation4 + $0x288] sm:$0xff]
    %v976 = vld [vmem:[#allocation4 + $0x290] sm:$0xff]
    %v977 = vld [vmem:[#allocation4 + $0x298] sm:$0xff]
    %v978 = vld [vmem:[#allocation4 + $0x2a0] sm:$0xff]
    %v979 = vld [vmem:[#allocation4 + $0x2a8] sm:$0xff]
    %v980 = vld [vmem:[#allocation4 + $0x2b0] sm:$0xff]
    %v981 = vld [vmem:[#allocation4 + $0x2b8] sm:$0xff]
    %v982 = vld [vmem:[#allocation4 + $0x2c0] sm:$0xff]
    %v983 = vld [vmem:[#allocation4 + $0x2c8] sm:$0xff]
    %v984 = vld [vmem:[#allocation4 + $0x2d0] sm:$0xff]
    %v985 = vld [vmem:[#allocation4 + $0x2d8] sm:$0xff]
    %v986 = vld [vmem:[#allocation4 + $0x2e0] sm:$0xff]
    %v987 = vld [vmem:[#allocation4 + $0x2e8] sm:$0xff]
    %v988 = vld [vmem:[#allocation4 + $0x2f0] sm:$0xff]
    %v989 = vld [vmem:[#allocation4 + $0x2f8] sm:$0xff]
    %v990 = vld [vmem:[#allocation4 + $0x300] sm:$0xff]
    %v991 = vld [vmem:[#allocation4 + $0x308] sm:$0xff]
    %v992 = vld [vmem:[#allocation4 + $0x310] sm:$0xff]
    %v993 = vld [vmem:[#allocation4 + $0x318] sm:$0xff]
    %v994 = vld [vmem:[#allocation4 + $0x320] sm:$0xff]
    %v995 = vld [vmem:[#allocation4 + $0x328] sm:$0xff]
    %v996 = vld [vmem:[#allocation4 + $0x330] sm:$0xff]
    %v997 = vld [vmem:[#allocation4 + $0x338] sm:$0xff]
    %v998 = vld [vmem:[#allocation4 + $0x340] sm:$0xff]
    %v999 = vld [vmem:[#allocation4 + $0x348] sm:$0xff]
    %v1000 = vld [vmem:[#allocation4 + $0x350] sm:$0xff]
    %v1001 = vld [vmem:[#allocation4 + $0x358] sm:$0xff]
    %v1002 = vld [vmem:[#allocation4 + $0x360] sm:$0xff]
    %v1003 = vld [vmem:[#allocation4 + $0x368] sm:$0xff]
    %v1004 = vld [vmem:[#allocation4 + $0x370] sm:$0xff]
    %v1005 = vld [vmem:[#allocation4 + $0x378] sm:$0xff]
    %v1006 = vld [vmem:[#allocation4 + $0x380] sm:$0xff]
    %v1007 = vld [vmem:[#allocation4 + $0x388] sm:$0xff]
    %v1008 = vld [vmem:[#allocation4 + $0x390] sm:$0xff]
    %v1009 = vld [vmem:[#allocation4 + $0x398] sm:$0xff]
    %v1010 = vld [vmem:[#allocation4 + $0x3a0] sm:$0xff]
    %v1011 = vld [vmem:[#allocation4 + $0x3a8] sm:$0xff]
    %v1012 = vld [vmem:[#allocation4 + $0x3b0] sm:$0xff]
    %v1013 = vld [vmem:[#allocation4 + $0x3b8] sm:$0xff]
    %v1014 = vld [vmem:[#allocation4 + $0x3c0] sm:$0xff]
    %v1015 = vld [vmem:[#allocation4 + $0x3c8] sm:$0xff]
    %v1016 = vld [vmem:[#allocation4 + $0x3d0] sm:$0xff]
    %v1017 = vld [vmem:[#allocation4 + $0x3d8] sm:$0xff]
    %v1018 = vld [vmem:[#allocation4 + $0x3e0] sm:$0xff]
    %v1019 = vld [vmem:[#allocation4 + $0x3e8] sm:$0xff]
    %v1020 = vld [vmem:[#allocation4 + $0x3f0] sm:$0xff]
    %v1021 = vld [vmem:[#allocation4 + $0x3f8] sm:$0xff]
    %v1022 = vld [vmem:[#allocation4 + $0x400] sm:$0xff]
    %v1023 = vld [vmem:[#allocation4 + $0x408] sm:$0xff]
    %v1024 = vld [vmem:[#allocation4 + $0x410] sm:$0xff]
    %v1025 = vld [vmem:[#allocation4 + $0x418] sm:$0xff]
    %v1026 = vld [vmem:[#allocation4 + $0x420] sm:$0xff]
    %v1027 = vld [vmem:[#allocation4 + $0x428] sm:$0xff]
    %v1028 = vld [vmem:[#allocation4 + $0x430] sm:$0xff]
    %v1029 = vld [vmem:[#allocation4 + $0x438] sm:$0xff]
    %v1030 = vld [vmem:[#allocation4 + $0x440] sm:$0xff]
    %v1031 = vld [vmem:[#allocation4 + $0x448] sm:$0xff]
    %v1032 = vld [vmem:[#allocation4 + $0x450] sm:$0xff]
    %v1033 = vld [vmem:[#allocation4 + $0x458] sm:$0xff]
    %v1034 = vld [vmem:[#allocation4 + $0x460] sm:$0xff]
    %v1035 = vld [vmem:[#allocation4 + $0x468] sm:$0xff]
    %v1036 = vld [vmem:[#allocation4 + $0x470] sm:$0xff]
    %v1037 = vld [vmem:[#allocation4 + $0x478] sm:$0xff]
    %v1038 = vld [vmem:[#allocation4 + $0x480] sm:$0xff]
    %v1039 = vld [vmem:[#allocation4 + $0x488] sm:$0xff]
    %v1040 = vld [vmem:[#allocation4 + $0x490] sm:$0xff]
    %v1041 = vld [vmem:[#allocation4 + $0x498] sm:$0xff]
    %v1042 = vld [vmem:[#allocation4 + $0x4a0] sm:$0xff]
    %v1043 = vld [vmem:[#allocation4 + $0x4a8] sm:$0xff]
    %v1044 = vld [vmem:[#allocation4 + $0x4b0] sm:$0xff]
    %v1045 = vld [vmem:[#allocation4 + $0x4b8] sm:$0xff]
    %v1046 = vld [vmem:[#allocation4 + $0x4c0] sm:$0xff]
    %v1047 = vld [vmem:[#allocation4 + $0x4c8] sm:$0xff]
    %v1048 = vld [vmem:[#allocation4 + $0x4d0] sm:$0xff]
    %v1049 = vld [vmem:[#allocation4 + $0x4d8] sm:$0xff]
    %v1050 = vld [vmem:[#allocation4 + $0x4e0] sm:$0xff]
    %v1051 = vld [vmem:[#allocation4 + $0x4e8] sm:$0xff]
    %v1052 = vld [vmem:[#allocation4 + $0x4f0] sm:$0xff]
    %v1053 = vld [vmem:[#allocation4 + $0x4f8] sm:$0xff]
    %v1054 = vld [vmem:[#allocation4 + $0x500] sm:$0xff]
    %v1055 = vld [vmem:[#allocation4 + $0x508] sm:$0xff]
    %v1056 = vld [vmem:[#allocation4 + $0x510] sm:$0xff]
    %v1057 = vld [vmem:[#allocation4 + $0x518] sm:$0xff]
    %v1058 = vld [vmem:[#allocation4 + $0x520] sm:$0xff]
    %v1059 = vld [vmem:[#allocation4 + $0x528] sm:$0xff]
    %v1060 = vld [vmem:[#allocation4 + $0x530] sm:$0xff]
    %v1061 = vld [vmem:[#allocation4 + $0x538] sm:$0xff]
    %v1062 = vld [vmem:[#allocation4 + $0x540] sm:$0xff]
    %v1063 = vld [vmem:[#allocation4 + $0x548] sm:$0xff]
    %v1064 = vld [vmem:[#allocation4 + $0x550] sm:$0xff]
    %v1065 = vld [vmem:[#allocation4 + $0x558] sm:$0xff]
    %v1066 = vld [vmem:[#allocation4 + $0x560] sm:$0xff]
    %v1067 = vld [vmem:[#allocation4 + $0x568] sm:$0xff]
    %v1068 = vld [vmem:[#allocation4 + $0x570] sm:$0xff]
    %v1069 = vld [vmem:[#allocation4 + $0x578] sm:$0xff]
    %v1070 = vld [vmem:[#allocation4 + $0x580] sm:$0xff]
    %v1071 = vld [vmem:[#allocation4 + $0x588] sm:$0xff]
    %v1072 = vld [vmem:[#allocation4 + $0x590] sm:$0xff]
    %v1073 = vld [vmem:[#allocation4 + $0x598] sm:$0xff]
    %v1074 = vld [vmem:[#allocation4 + $0x5a0] sm:$0xff]
    %v1075 = vld [vmem:[#allocation4 + $0x5a8] sm:$0xff]
    %v1076 = vld [vmem:[#allocation4 + $0x5b0] sm:$0xff]
    %v1077 = vld [vmem:[#allocation4 + $0x5b8] sm:$0xff]
    %v1078 = vld [vmem:[#allocation4 + $0x5c0] sm:$0xff]
    %v1079 = vld [vmem:[#allocation4 + $0x5c8] sm:$0xff]
    %v1080 = vld [vmem:[#allocation4 + $0x5d0] sm:$0xff]
    %v1081 = vld [vmem:[#allocation4 + $0x5d8] sm:$0xff]
    %v1082 = vld [vmem:[#allocation4 + $0x5e0] sm:$0xff]
    %v1083 = vld [vmem:[#allocation4 + $0x5e8] sm:$0xff]
    %v1084 = vld [vmem:[#allocation4 + $0x5f0] sm:$0xff]
    %v1085 = vld [vmem:[#allocation4 + $0x5f8] sm:$0xff]
    %v1086 = vld [vmem:[#allocation4 + $0x600] sm:$0xff]
    %v1087 = vld [vmem:[#allocation4 + $0x608] sm:$0xff]
    %v1088 = vld [vmem:[#allocation4 + $0x610] sm:$0xff]
    %v1089 = vld [vmem:[#allocation4 + $0x618] sm:$0xff]
    %v1090 = vld [vmem:[#allocation4 + $0x620] sm:$0xff]
    %v1091 = vld [vmem:[#allocation4 + $0x628] sm:$0xff]
    %v1092 = vld [vmem:[#allocation4 + $0x630] sm:$0xff]
    %v1093 = vld [vmem:[#allocation4 + $0x638] sm:$0xff]
    %v1094 = vld [vmem:[#allocation4 + $0x640] sm:$0xff]
    %v1095 = vld [vmem:[#allocation4 + $0x648] sm:$0xff]
    %v1096 = vld [vmem:[#allocation4 + $0x650] sm:$0xff]
    %v1097 = vld [vmem:[#allocation4 + $0x658] sm:$0xff]
    %v1098 = vld [vmem:[#allocation4 + $0x660] sm:$0xff]
    %v1099 = vld [vmem:[#allocation4 + $0x668] sm:$0xff]
    %v1100 = vld [vmem:[#allocation4 + $0x670] sm:$0xff]
    %v1101 = vld [vmem:[#allocation4 + $0x678] sm:$0xff]
    %v1102 = vld [vmem:[#allocation4 + $0x680] sm:$0xff]
    %v1103 = vld [vmem:[#allocation4 + $0x688] sm:$0xff]
    %v1104 = vld [vmem:[#allocation4 + $0x690] sm:$0xff]
    %v1105 = vld [vmem:[#allocation4 + $0x698] sm:$0xff]
    %v1106 = vld [vmem:[#allocation4 + $0x6a0] sm:$0xff]
    %v1107 = vld [vmem:[#allocation4 + $0x6a8] sm:$0xff]
    %v1108 = vld [vmem:[#allocation4 + $0x6b0] sm:$0xff]
    %v1109 = vld [vmem:[#allocation4 + $0x6b8] sm:$0xff]
    %v1110 = vld [vmem:[#allocation4 + $0x6c0] sm:$0xff]
    %v1111 = vld [vmem:[#allocation4 + $0x6c8] sm:$0xff]
    %v1112 = vld [vmem:[#allocation4 + $0x6d0] sm:$0xff]
    %v1113 = vld [vmem:[#allocation4 + $0x6d8] sm:$0xff]
    %v1114 = vld [vmem:[#allocation4 + $0x6e0] sm:$0xff]
    %v1115 = vld [vmem:[#allocation4 + $0x6e8] sm:$0xff]
    %v1116 = vld [vmem:[#allocation4 + $0x6f0] sm:$0xff]
    %v1117 = vld [vmem:[#allocation4 + $0x6f8] sm:$0xff]
    %v1118 = vld [vmem:[#allocation4 + $0x700] sm:$0xff]
    %v1119 = vld [vmem:[#allocation4 + $0x708] sm:$0xff]
    %v1120 = vld [vmem:[#allocation4 + $0x710] sm:$0xff]
    %v1121 = vld [vmem:[#allocation4 + $0x718] sm:$0xff]
    %v1122 = vld [vmem:[#allocation4 + $0x720] sm:$0xff]
    %v1123 = vld [vmem:[#allocation4 + $0x728] sm:$0xff]
    %v1124 = vld [vmem:[#allocation4 + $0x730] sm:$0xff]
    %v1125 = vld [vmem:[#allocation4 + $0x738] sm:$0xff]
    %v1126 = vld [vmem:[#allocation4 + $0x740] sm:$0xff]
    %v1127 = vld [vmem:[#allocation4 + $0x748] sm:$0xff]
    %v1128 = vld [vmem:[#allocation4 + $0x750] sm:$0xff]
    %v1129 = vld [vmem:[#allocation4 + $0x758] sm:$0xff]
    %v1130 = vld [vmem:[#allocation4 + $0x760] sm:$0xff]
    %v1131 = vld [vmem:[#allocation4 + $0x768] sm:$0xff]
    %v1132 = vld [vmem:[#allocation4 + $0x770] sm:$0xff]
    %v1133 = vld [vmem:[#allocation4 + $0x778] sm:$0xff]
    %v1134 = vld [vmem:[%s4] sm:$0x1]
    %v1136 = vlaneseq
    %v1137 = vshrl.u32 %v1136, 7
    %v1138 = vsub.s32 0, %v1137
    %v1139 = vrot.slane %v1134, %v1138
    %1141 = vmatprep.subr.mxu0 0.0
    %1142 = vmatpush1.msra.mxu0 %v894
    %1143 = vmatprep.subr.mxu0 0.0
    %1144 = vmatpush1.msra.mxu0 %v895
    %1145 = vmatprep.subr.mxu0 0.0
    %1146 = vmatpush1.msra.mxu0 %v896
    %1147 = vmatprep.subr.mxu0 0.0
    %1148 = vmatpush1.msra.mxu0 %v897
    %1149 = vmatprep.subr.mxu0 0.0
    %1150 = vmatpush1.msra.mxu0 %v898
    %1151 = vmatprep.subr.mxu0 0.0
    %1152 = vmatpush1.msra.mxu0 %v899
    %1153 = vmatprep.subr.mxu0 0.0
    %1154 = vmatpush1.msra.mxu0 %v900
    %1155 = vmatprep.subr.mxu0 0.0
    %1156 = vmatpush1.msra.mxu0 %v901
    %1157 = vmatprep.subr.mxu0 0.0
    %1158 = vmatpush1.msra.mxu0 %v902
    %1159 = vmatprep.subr.mxu0 0.0
    %1160 = vmatpush1.msra.mxu0 %v903
    %1161 = vmatprep.subr.mxu0 0.0
    %1162 = vmatpush1.msra.mxu0 %v904
    %1163 = vmatprep.subr.mxu0 0.0
    %1164 = vmatpush1.msra.mxu0 %v905
    %1165 = vmatprep.subr.mxu0 0.0
    %1166 = vmatpush1.msra.mxu0 %v906
    %1167 = vmatprep.subr.mxu0 0.0
    %1168 = vmatpush1.msra.mxu0 %v907
    %1169 = vmatprep.subr.mxu0 0.0
    %1170 = vmatpush1.msra.mxu0 %v908
    %1171 = vmatprep.subr.mxu0 0.0
    %1172 = vmatpush1.msra.mxu0 %v909
    %1173 = vmatprep.subr.mxu0 0.0
    %1174 = vmatpush1.msra.mxu0 %v910
    %1175 = vmatprep.subr.mxu0 0.0
    %1176 = vmatpush1.msra.mxu0 %v911
    %1177 = vmatprep.subr.mxu0 0.0
    %1178 = vmatpush1.msra.mxu0 %v912
    %1179 = vmatprep.subr.mxu0 0.0
    %1180 = vmatpush1.msra.mxu0 %v913
    %1181 = vmatprep.subr.mxu0 0.0
    %1182 = vmatpush1.msra.mxu0 %v914
    %1183 = vmatprep.subr.mxu0 0.0
    %1184 = vmatpush1.msra.mxu0 %v915
    %1185 = vmatprep.subr.mxu0 0.0
    %1186 = vmatpush1.msra.mxu0 %v916
    %1187 = vmatprep.subr.mxu0 0.0
    %1188 = vmatpush1.msra.mxu0 %v917
    %1189 = vmatprep.subr.mxu0 0.0
    %1190 = vmatpush1.msra.mxu0 %v918
    %1191 = vmatprep.subr.mxu0 0.0
    %1192 = vmatpush1.msra.mxu0 %v919
    %1193 = vmatprep.subr.mxu0 0.0
    %1194 = vmatpush1.msra.mxu0 %v920
    %1195 = vmatprep.subr.mxu0 0.0
    %1196 = vmatpush1.msra.mxu0 %v921
    %1197 = vmatprep.subr.mxu0 0.0
    %1198 = vmatpush1.msra.mxu0 %v922
    %1199 = vmatprep.subr.mxu0 0.0
    %1200 = vmatpush1.msra.mxu0 %v923
    %1201 = vmatprep.subr.mxu0 0.0
    %1202 = vmatpush1.msra.mxu0 %v924
    %1203 = vmatprep.subr.mxu0 0.0
    %1204 = vmatpush1.msra.mxu0 %v925
    %1205 = vmatprep.mubr.f32.mxu0 %v880
    %1206 = vmatmul.mubr.f32.gmra.mrb[0].mxu0 %v879
    %v1207 = vpop.f32.mrb[0].mxu0
    %v1208 = vadd.f32 %v1139, %v1207
    %v1209 = vpop.f32.mrb[0].mxu0
    %1210 = vdwg.mxu0
    %1211 = vmatprep.subr.mxu0 0.0
    %1212 = vmatpush1.msra.mxu0 %v926
    %1213 = vmatprep.subr.mxu0 0.0
    %1214 = vmatpush1.msra.mxu0 %v927
    %1215 = vmatprep.subr.mxu0 0.0
    %1216 = vmatpush1.msra.mxu0 %v928
    %1217 = vmatprep.subr.mxu0 0.0
    %1218 = vmatpush1.msra.mxu0 %v929
    %1219 = vmatprep.subr.mxu0 0.0
    %1220 = vmatpush1.msra.mxu0 %v930
    %1221 = vmatprep.subr.mxu0 0.0
    %1222 = vmatpush1.msra.mxu0 %v931
    %1223 = vmatprep.subr.mxu0 0.0
    %1224 = vmatpush1.msra.mxu0 %v932
    %1225 = vmatprep.subr.mxu0 0.0
    %1226 = vmatpush1.msra.mxu0 %v933
    %1227 = vmatprep.subr.mxu0 0.0
    %1228 = vmatpush1.msra.mxu0 %v934
    %1229 = vmatprep.subr.mxu0 0.0
    %1230 = vmatpush1.msra.mxu0 %v935
    %1231 = vmatprep.subr.mxu0 0.0
    %1232 = vmatpush1.msra.mxu0 %v936
    %1233 = vmatprep.subr.mxu0 0.0
    %1234 = vmatpush1.msra.mxu0 %v937
    %1235 = vmatprep.subr.mxu0 0.0
    %1236 = vmatpush1.msra.mxu0 %v938
    %1237 = vmatprep.subr.mxu0 0.0
    %1238 = vmatpush1.msra.mxu0 %v939
    %1239 = vmatprep.subr.mxu0 0.0
    %1240 = vmatpush1.msra.mxu0 %v940
    %1241 = vmatprep.subr.mxu0 0.0
    %1242 = vmatpush1.msra.mxu0 %v941
    %1243 = vmatprep.subr.mxu0 0.0
    %1244 = vmatpush1.msra.mxu0 %v942
    %1245 = vmatprep.subr.mxu0 0.0
    %1246 = vmatpush1.msra.mxu0 %v943
    %1247 = vmatprep.subr.mxu0 0.0
    %1248 = vmatpush1.msra.mxu0 %v944
    %1249 = vmatprep.subr.mxu0 0.0
    %1250 = vmatpush1.msra.mxu0 %v945
    %1251 = vmatprep.subr.mxu0 0.0
    %1252 = vmatpush1.msra.mxu0 %v946
    %1253 = vmatprep.subr.mxu0 0.0
    %1254 = vmatpush1.msra.mxu0 %v947
    %1255 = vmatprep.subr.mxu0 0.0
    %1256 = vmatpush1.msra.mxu0 %v948
    %1257 = vmatprep.subr.mxu0 0.0
    %1258 = vmatpush1.msra.mxu0 %v949
    %1259 = vmatprep.subr.mxu0 0.0
    %1260 = vmatpush1.msra.mxu0 %v950
    %1261 = vmatprep.subr.mxu0 0.0
    %1262 = vmatpush1.msra.mxu0 %v951
    %1263 = vmatprep.subr.mxu0 0.0
    %1264 = vmatpush1.msra.mxu0 %v952
    %1265 = vmatprep.subr.mxu0 0.0
    %1266 = vmatpush1.msra.mxu0 %v953
    %1267 = vmatprep.subr.mxu0 0.0
    %1268 = vmatpush1.msra.mxu0 %v954
    %1269 = vmatprep.subr.mxu0 0.0
    %1270 = vmatpush1.msra.mxu0 %v955
    %1271 = vmatprep.subr.mxu0 0.0
    %1272 = vmatpush1.msra.mxu0 %v956
    %1273 = vmatprep.subr.mxu0 0.0
    %1274 = vmatpush1.msra.mxu0 %v957
    %1275 = vmatprep.mubr.f32.mxu0 %v882
    %1276 = vmatmul.mubr.f32.gmra.mrb[0].mxu0 %v881
    %v1277 = vpop.f32.mrb[0].mxu0
    %v1278 = vadd.f32 %v1208, %v1277
    %v1279 = vpop.f32.mrb[0].mxu0
    %1280 = vdwg.mxu0
    %1281 = vmatprep.subr.mxu0 0.0
    %1282 = vmatpush1.msra.mxu0 %v958
    %1283 = vmatprep.subr.mxu0 0.0
    %1284 = vmatpush1.msra.mxu0 %v959
    %1285 = vmatprep.subr.mxu0 0.0
    %1286 = vmatpush1.msra.mxu0 %v960
    %1287 = vmatprep.subr.mxu0 0.0
    %1288 = vmatpush1.msra.mxu0 %v961
    %1289 = vmatprep.subr.mxu0 0.0
    %1290 = vmatpush1.msra.mxu0 %v962
    %1291 = vmatprep.subr.mxu0 0.0
    %1292 = vmatpush1.msra.mxu0 %v963
    %1293 = vmatprep.subr.mxu0 0.0
    %1294 = vmatpush1.msra.mxu0 %v964
    %1295 = vmatprep.subr.mxu0 0.0
    %1296 = vmatpush1.msra.mxu0 %v965
    %1297 = vmatprep.subr.mxu0 0.0
    %1298 = vmatpush1.msra.mxu0 %v966
    %1299 = vmatprep.subr.mxu0 0.0
    %1300 = vmatpush1.msra.mxu0 %v967
    %1301 = vmatprep.subr.mxu0 0.0
    %1302 = vmatpush1.msra.mxu0 %v968
    %1303 = vmatprep.subr.mxu0 0.0
    %1304 = vmatpush1.msra.mxu0 %v969
    %1305 = vmatprep.subr.mxu0 0.0
    %1306 = vmatpush1.msra.mxu0 %v970
    %1307 = vmatprep.subr.mxu0 0.0
    %1308 = vmatpush1.msra.mxu0 %v971
    %1309 = vmatprep.subr.mxu0 0.0
    %1310 = vmatpush1.msra.mxu0 %v972
    %1311 = vmatprep.subr.mxu0 0.0
    %1312 = vmatpush1.msra.mxu0 %v973
    %1313 = vmatprep.subr.mxu0 0.0
    %1314 = vmatpush1.msra.mxu0 %v974
    %1315 = vmatprep.subr.mxu0 0.0
    %1316 = vmatpush1.msra.mxu0 %v975
    %1317 = vmatprep.subr.mxu0 0.0
    %1318 = vmatpush1.msra.mxu0 %v976
    %1319 = vmatprep.subr.mxu0 0.0
    %1320 = vmatpush1.msra.mxu0 %v977
    %1321 = vmatprep.subr.mxu0 0.0
    %1322 = vmatpush1.msra.mxu0 %v978
    %1323 = vmatprep.subr.mxu0 0.0
    %1324 = vmatpush1.msra.mxu0 %v979
    %1325 = vmatprep.subr.mxu0 0.0
    %1326 = vmatpush1.msra.mxu0 %v980
    %1327 = vmatprep.subr.mxu0 0.0
    %1328 = vmatpush1.msra.mxu0 %v981
    %1329 = vmatprep.subr.mxu0 0.0
    %1330 = vmatpush1.msra.mxu0 %v982
    %1331 = vmatprep.subr.mxu0 0.0
    %1332 = vmatpush1.msra.mxu0 %v983
    %1333 = vmatprep.subr.mxu0 0.0
    %1334 = vmatpush1.msra.mxu0 %v984
    %1335 = vmatprep.subr.mxu0 0.0
    %1336 = vmatpush1.msra.mxu0 %v985
    %1337 = vmatprep.subr.mxu0 0.0
    %1338 = vmatpush1.msra.mxu0 %v986
    %1339 = vmatprep.subr.mxu0 0.0
    %1340 = vmatpush1.msra.mxu0 %v987
    %1341 = vmatprep.subr.mxu0 0.0
    %1342 = vmatpush1.msra.mxu0 %v988
    %1343 = vmatprep.subr.mxu0 0.0
    %1344 = vmatpush1.msra.mxu0 %v989
    %1345 = vmatprep.mubr.f32.mxu0 %v884
    %1346 = vmatmul.mubr.f32.gmra.mrb[0].mxu0 %v883
    %v1347 = vpop.f32.mrb[0].mxu0
    %v1348 = vadd.f32 %v1278, %v1347
    %v1349 = vpop.f32.mrb[0].mxu0
    %1350 = vdwg.mxu0
    %1351 = vmatprep.subr.mxu0 0.0
    %1352 = vmatpush1.msra.mxu0 %v990
    %1353 = vmatprep.subr.mxu0 0.0
    %1354 = vmatpush1.msra.mxu0 %v991
    %1355 = vmatprep.subr.mxu0 0.0
    %1356 = vmatpush1.msra.mxu0 %v992
    %1357 = vmatprep.subr.mxu0 0.0
    %1358 = vmatpush1.msra.mxu0 %v993
    %1359 = vmatprep.subr.mxu0 0.0
    %1360 = vmatpush1.msra.mxu0 %v994
    %1361 = vmatprep.subr.mxu0 0.0
    %1362 = vmatpush1.msra.mxu0 %v995
    %1363 = vmatprep.subr.mxu0 0.0
    %1364 = vmatpush1.msra.mxu0 %v996
    %1365 = vmatprep.subr.mxu0 0.0
    %1366 = vmatpush1.msra.mxu0 %v997
    %1367 = vmatprep.subr.mxu0 0.0
    %1368 = vmatpush1.msra.mxu0 %v998
    %1369 = vmatprep.subr.mxu0 0.0
    %1370 = vmatpush1.msra.mxu0 %v999
    %1371 = vmatprep.subr.mxu0 0.0
    %1372 = vmatpush1.msra.mxu0 %v1000
    %1373 = vmatprep.subr.mxu0 0.0
    %1374 = vmatpush1.msra.mxu0 %v1001
    %1375 = vmatprep.subr.mxu0 0.0
    %1376 = vmatpush1.msra.mxu0 %v1002
    %1377 = vmatprep.subr.mxu0 0.0
    %1378 = vmatpush1.msra.mxu0 %v1003
    %1379 = vmatprep.subr.mxu0 0.0
    %1380 = vmatpush1.msra.mxu0 %v1004
    %1381 = vmatprep.subr.mxu0 0.0
    %1382 = vmatpush1.msra.mxu0 %v1005
    %1383 = vmatprep.subr.mxu0 0.0
    %1384 = vmatpush1.msra.mxu0 %v1006
    %1385 = vmatprep.subr.mxu0 0.0
    %1386 = vmatpush1.msra.mxu0 %v1007
    %1387 = vmatprep.subr.mxu0 0.0
    %1388 = vmatpush1.msra.mxu0 %v1008
    %1389 = vmatprep.subr.mxu0 0.0
    %1390 = vmatpush1.msra.mxu0 %v1009
    %1391 = vmatprep.subr.mxu0 0.0
    %1392 = vmatpush1.msra.mxu0 %v1010
    %1393 = vmatprep.subr.mxu0 0.0
    %1394 = vmatpush1.msra.mxu0 %v1011
    %1395 = vmatprep.subr.mxu0 0.0
    %1396 = vmatpush1.msra.mxu0 %v1012
    %1397 = vmatprep.subr.mxu0 0.0
    %1398 = vmatpush1.msra.mxu0 %v1013
    %1399 = vmatprep.subr.mxu0 0.0
    %1400 = vmatpush1.msra.mxu0 %v1014
    %1401 = vmatprep.subr.mxu0 0.0
    %1402 = vmatpush1.msra.mxu0 %v1015
    %1403 = vmatprep.subr.mxu0 0.0
    %1404 = vmatpush1.msra.mxu0 %v1016
    %1405 = vmatprep.subr.mxu0 0.0
    %1406 = vmatpush1.msra.mxu0 %v1017
    %1407 = vmatprep.subr.mxu0 0.0
    %1408 = vmatpush1.msra.mxu0 %v1018
    %1409 = vmatprep.subr.mxu0 0.0
    %1410 = vmatpush1.msra.mxu0 %v1019
    %1411 = vmatprep.subr.mxu0 0.0
    %1412 = vmatpush1.msra.mxu0 %v1020
    %1413 = vmatprep.subr.mxu0 0.0
    %1414 = vmatpush1.msra.mxu0 %v1021
    %1415 = vmatprep.mubr.f32.mxu0 %v886
    %1416 = vmatmul.mubr.f32.gmra.mrb[0].mxu0 %v885
    %v1417 = vpop.f32.mrb[0].mxu0
    %v1418 = vadd.f32 %v1348, %v1417
    %v1419 = vpop.f32.mrb[0].mxu0
    %1420 = vdwg.mxu0
    %1421 = vmatprep.subr.mxu0 0.0
    %1422 = vmatpush1.msra.mxu0 %v1022
    %1423 = vmatprep.subr.mxu0 0.0
    %1424 = vmatpush1.msra.mxu0 %v1023
    %1425 = vmatprep.subr.mxu0 0.0
    %1426 = vmatpush1.msra.mxu0 %v1024
    %1427 = vmatprep.subr.mxu0 0.0
    %1428 = vmatpush1.msra.mxu0 %v1025
    %1429 = vmatprep.subr.mxu0 0.0
    %1430 = vmatpush1.msra.mxu0 %v1026
    %1431 = vmatprep.subr.mxu0 0.0
    %1432 = vmatpush1.msra.mxu0 %v1027
    %1433 = vmatprep.subr.mxu0 0.0
    %1434 = vmatpush1.msra.mxu0 %v1028
    %1435 = vmatprep.subr.mxu0 0.0
    %1436 = vmatpush1.msra.mxu0 %v1029
    %1437 = vmatprep.subr.mxu0 0.0
    %1438 = vmatpush1.msra.mxu0 %v1030
    %1439 = vmatprep.subr.mxu0 0.0
    %1440 = vmatpush1.msra.mxu0 %v1031
    %1441 = vmatprep.subr.mxu0 0.0
    %1442 = vmatpush1.msra.mxu0 %v1032
    %1443 = vmatprep.subr.mxu0 0.0
    %1444 = vmatpush1.msra.mxu0 %v1033
    %1445 = vmatprep.subr.mxu0 0.0
    %1446 = vmatpush1.msra.mxu0 %v1034
    %1447 = vmatprep.subr.mxu0 0.0
    %1448 = vmatpush1.msra.mxu0 %v1035
    %1449 = vmatprep.subr.mxu0 0.0
    %1450 = vmatpush1.msra.mxu0 %v1036
    %1451 = vmatprep.subr.mxu0 0.0
    %1452 = vmatpush1.msra.mxu0 %v1037
    %1453 = vmatprep.subr.mxu0 0.0
    %1454 = vmatpush1.msra.mxu0 %v1038
    %1455 = vmatprep.subr.mxu0 0.0
    %1456 = vmatpush1.msra.mxu0 %v1039
    %1457 = vmatprep.subr.mxu0 0.0
    %1458 = vmatpush1.msra.mxu0 %v1040
    %1459 = vmatprep.subr.mxu0 0.0
    %1460 = vmatpush1.msra.mxu0 %v1041
    %1461 = vmatprep.subr.mxu0 0.0
    %1462 = vmatpush1.msra.mxu0 %v1042
    %1463 = vmatprep.subr.mxu0 0.0
    %1464 = vmatpush1.msra.mxu0 %v1043
    %1465 = vmatprep.subr.mxu0 0.0
    %1466 = vmatpush1.msra.mxu0 %v1044
    %1467 = vmatprep.subr.mxu0 0.0
    %1468 = vmatpush1.msra.mxu0 %v1045
    %1469 = vmatprep.subr.mxu0 0.0
    %1470 = vmatpush1.msra.mxu0 %v1046
    %1471 = vmatprep.subr.mxu0 0.0
    %1472 = vmatpush1.msra.mxu0 %v1047
    %1473 = vmatprep.subr.mxu0 0.0
    %1474 = vmatpush1.msra.mxu0 %v1048
    %1475 = vmatprep.subr.mxu0 0.0
    %1476 = vmatpush1.msra.mxu0 %v1049
    %1477 = vmatprep.subr.mxu0 0.0
    %1478 = vmatpush1.msra.mxu0 %v1050
    %1479 = vmatprep.subr.mxu0 0.0
    %1480 = vmatpush1.msra.mxu0 %v1051
    %1481 = vmatprep.subr.mxu0 0.0
    %1482 = vmatpush1.msra.mxu0 %v1052
    %1483 = vmatprep.subr.mxu0 0.0
    %1484 = vmatpush1.msra.mxu0 %v1053
    %1485 = vmatprep.mubr.f32.mxu0 %v888
    %1486 = vmatmul.mubr.f32.gmra.mrb[0].mxu0 %v887
    %v1487 = vpop.f32.mrb[0].mxu0
    %v1488 = vadd.f32 %v1418, %v1487
    %v1489 = vpop.f32.mrb[0].mxu0
    %1490 = vdwg.mxu0
    %1491 = vmatprep.subr.mxu0 0.0
    %1492 = vmatpush1.msra.mxu0 %v1054
    %1493 = vmatprep.subr.mxu0 0.0
    %1494 = vmatpush1.msra.mxu0 %v1055
    %1495 = vmatprep.subr.mxu0 0.0
    %1496 = vmatpush1.msra.mxu0 %v1056
    %1497 = vmatprep.subr.mxu0 0.0
    %1498 = vmatpush1.msra.mxu0 %v1057
    %1499 = vmatprep.subr.mxu0 0.0
    %1500 = vmatpush1.msra.mxu0 %v1058
    %1501 = vmatprep.subr.mxu0 0.0
    %1502 = vmatpush1.msra.mxu0 %v1059
    %1503 = vmatprep.subr.mxu0 0.0
    %1504 = vmatpush1.msra.mxu0 %v1060
    %1505 = vmatprep.subr.mxu0 0.0
    %1506 = vmatpush1.msra.mxu0 %v1061
    %1507 = vmatprep.subr.mxu0 0.0
    %1508 = vmatpush1.msra.mxu0 %v1062
    %1509 = vmatprep.subr.mxu0 0.0
    %1510 = vmatpush1.msra.mxu0 %v1063
    %1511 = vmatprep.subr.mxu0 0.0
    %1512 = vmatpush1.msra.mxu0 %v1064
    %1513 = vmatprep.subr.mxu0 0.0
    %1514 = vmatpush1.msra.mxu0 %v1065
    %1515 = vmatprep.subr.mxu0 0.0
    %1516 = vmatpush1.msra.mxu0 %v1066
    %1517 = vmatprep.subr.mxu0 0.0
    %1518 = vmatpush1.msra.mxu0 %v1067
    %1519 = vmatprep.subr.mxu0 0.0
    %1520 = vmatpush1.msra.mxu0 %v1068
    %1521 = vmatprep.subr.mxu0 0.0
    %1522 = vmatpush1.msra.mxu0 %v1069
    %1523 = vmatprep.subr.mxu0 0.0
    %1524 = vmatpush1.msra.mxu0 %v1070
    %1525 = vmatprep.subr.mxu0 0.0
    %1526 = vmatpush1.msra.mxu0 %v1071
    %1527 = vmatprep.subr.mxu0 0.0
    %1528 = vmatpush1.msra.mxu0 %v1072
    %1529 = vmatprep.subr.mxu0 0.0
    %1530 = vmatpush1.msra.mxu0 %v1073
    %1531 = vmatprep.subr.mxu0 0.0
    %1532 = vmatpush1.msra.mxu0 %v1074
    %1533 = vmatprep.subr.mxu0 0.0
    %1534 = vmatpush1.msra.mxu0 %v1075
    %1535 = vmatprep.subr.mxu0 0.0
    %1536 = vmatpush1.msra.mxu0 %v1076
    %1537 = vmatprep.subr.mxu0 0.0
    %1538 = vmatpush1.msra.mxu0 %v1077
    %1539 = vmatprep.subr.mxu0 0.0
    %1540 = vmatpush1.msra.mxu0 %v1078
    %1541 = vmatprep.subr.mxu0 0.0
    %1542 = vmatpush1.msra.mxu0 %v1079
    %1543 = vmatprep.subr.mxu0 0.0
    %1544 = vmatpush1.msra.mxu0 %v1080
    %1545 = vmatprep.subr.mxu0 0.0
    %1546 = vmatpush1.msra.mxu0 %v1081
    %1547 = vmatprep.subr.mxu0 0.0
    %1548 = vmatpush1.msra.mxu0 %v1082
    %1549 = vmatprep.subr.mxu0 0.0
    %1550 = vmatpush1.msra.mxu0 %v1083
    %1551 = vmatprep.subr.mxu0 0.0
    %1552 = vmatpush1.msra.mxu0 %v1084
    %1553 = vmatprep.subr.mxu0 0.0
    %1554 = vmatpush1.msra.mxu0 %v1085
    %1555 = vmatprep.mubr.f32.mxu0 %v890
    %1556 = vmatmul.mubr.f32.gmra.mrb[0].mxu0 %v889
    %v1557 = vpop.f32.mrb[0].mxu0
    %v1558 = vadd.f32 %v1488, %v1557
    %v1559 = vpop.f32.mrb[0].mxu0
    %1560 = vdwg.mxu0
    %1561 = vmatprep.subr.mxu0 0.0
    %1562 = vmatpush1.msra.mxu0 %v1086
    %1563 = vmatprep.subr.mxu0 0.0
    %1564 = vmatpush1.msra.mxu0 %v1087
    %1565 = vmatprep.subr.mxu0 0.0
    %1566 = vmatpush1.msra.mxu0 %v1088
    %1567 = vmatprep.subr.mxu0 0.0
    %1568 = vmatpush1.msra.mxu0 %v1089
    %1569 = vmatprep.subr.mxu0 0.0
    %1570 = vmatpush1.msra.mxu0 %v1090
    %1571 = vmatprep.subr.mxu0 0.0
    %1572 = vmatpush1.msra.mxu0 %v1091
    %1573 = vmatprep.subr.mxu0 0.0
    %1574 = vmatpush1.msra.mxu0 %v1092
    %1575 = vmatprep.subr.mxu0 0.0
    %1576 = vmatpush1.msra.mxu0 %v1093
    %1577 = vmatprep.subr.mxu0 0.0
    %1578 = vmatpush1.msra.mxu0 %v1094
    %1579 = vmatprep.subr.mxu0 0.0
    %1580 = vmatpush1.msra.mxu0 %v1095
    %1581 = vmatprep.subr.mxu0 0.0
    %1582 = vmatpush1.msra.mxu0 %v1096
    %1583 = vmatprep.subr.mxu0 0.0
    %1584 = vmatpush1.msra.mxu0 %v1097
    %1585 = vmatprep.subr.mxu0 0.0
    %1586 = vmatpush1.msra.mxu0 %v1098
    %1587 = vmatprep.subr.mxu0 0.0
    %1588 = vmatpush1.msra.mxu0 %v1099
    %1589 = vmatprep.subr.mxu0 0.0
    %1590 = vmatpush1.msra.mxu0 %v1100
    %1591 = vmatprep.subr.mxu0 0.0
    %1592 = vmatpush1.msra.mxu0 %v1101
    %1593 = vmatprep.subr.mxu0 0.0
    %1594 = vmatpush1.msra.mxu0 %v1102
    %1595 = vmatprep.subr.mxu0 0.0
    %1596 = vmatpush1.msra.mxu0 %v1103
    %1597 = vmatprep.subr.mxu0 0.0
    %1598 = vmatpush1.msra.mxu0 %v1104
    %1599 = vmatprep.subr.mxu0 0.0
    %1600 = vmatpush1.msra.mxu0 %v1105
    %1601 = vmatprep.subr.mxu0 0.0
    %1602 = vmatpush1.msra.mxu0 %v1106
    %1603 = vmatprep.subr.mxu0 0.0
    %1604 = vmatpush1.msra.mxu0 %v1107
    %1605 = vmatprep.subr.mxu0 0.0
    %1606 = vmatpush1.msra.mxu0 %v1108
    %1607 = vmatprep.subr.mxu0 0.0
    %1608 = vmatpush1.msra.mxu0 %v1109
    %1609 = vmatprep.subr.mxu0 0.0
    %1610 = vmatpush1.msra.mxu0 %v1110
    %1611 = vmatprep.subr.mxu0 0.0
    %1612 = vmatpush1.msra.mxu0 %v1111
    %1613 = vmatprep.subr.mxu0 0.0
    %1614 = vmatpush1.msra.mxu0 %v1112
    %1615 = vmatprep.subr.mxu0 0.0
    %1616 = vmatpush1.msra.mxu0 %v1113
    %1617 = vmatprep.subr.mxu0 0.0
    %1618 = vmatpush1.msra.mxu0 %v1114
    %1619 = vmatprep.subr.mxu0 0.0
    %1620 = vmatpush1.msra.mxu0 %v1115
    %1621 = vmatprep.subr.mxu0 0.0
    %1622 = vmatpush1.msra.mxu0 %v1116
    %1623 = vmatprep.subr.mxu0 0.0
    %1624 = vmatpush1.msra.mxu0 %v1117
    %1625 = vmatprep.mubr.f32.mxu0 %v892
    %1626 = vmatmul.mubr.f32.gmra.mrb[0].mxu0 %v891
    %v1627 = vpop.f32.mrb[0].mxu0
    %v1628 = vadd.f32 %v1558, %v1627
    %v1629 = vpop.f32.mrb[0].mxu0
    %1630 = vdwg.mxu0
    %1631 = vmatprep.subr.mxu0 0.0
    %1632 = vmatpush1.msra.mxu0 %v1118
    %1633 = vmatprep.subr.mxu0 0.0
    %1634 = vmatpush1.msra.mxu0 %v1119
    %1635 = vmatprep.subr.mxu0 0.0
    %1636 = vmatpush1.msra.mxu0 %v1120
    %1637 = vmatprep.subr.mxu0 0.0
    %1638 = vmatpush1.msra.mxu0 %v1121
    %1639 = vmatprep.subr.mxu0 0.0
    %1640 = vmatpush1.msra.mxu0 %v1122
    %1641 = vmatprep.subr.mxu0 0.0
    %1642 = vmatpush1.msra.mxu0 %v1123
    %1643 = vmatprep.subr.mxu0 0.0
    %1644 = vmatpush1.msra.mxu0 %v1124
    %1645 = vmatprep.subr.mxu0 0.0
    %1646 = vmatpush1.msra.mxu0 %v1125
    %1647 = vmatprep.subr.mxu0 0.0
    %1648 = vmatpush1.msra.mxu0 %v1126
    %1649 = vmatprep.subr.mxu0 0.0
    %1650 = vmatpush1.msra.mxu0 %v1127
    %1651 = vmatprep.subr.mxu0 0.0
    %1652 = vmatpush1.msra.mxu0 %v1128
    %1653 = vmatprep.subr.mxu0 0.0
    %1654 = vmatpush1.msra.mxu0 %v1129
    %1655 = vmatprep.subr.mxu0 0.0
    %1656 = vmatpush1.msra.mxu0 %v1130
    %1657 = vmatprep.subr.mxu0 0.0
    %1658 = vmatpush1.msra.mxu0 %v1131
    %1659 = vmatprep.subr.mxu0 0.0
    %1660 = vmatpush1.msra.mxu0 %v1132
    %1661 = vmatprep.subr.mxu0 0.0
    %1662 = vmatpush1.msra.mxu0 %v1133
    %1663 = vmatprep.subr.mxu0 0.0
    %1664 = vmatpush1.msra.mxu0 0.0
    %1665 = vmatprep.subr.mxu0 0.0
    %1666 = vmatpush1.msra.mxu0 0.0
    %1667 = vmatprep.subr.mxu0 0.0
    %1668 = vmatpush1.msra.mxu0 0.0
    %1669 = vmatprep.subr.mxu0 0.0
    %1670 = vmatpush1.msra.mxu0 0.0
    %1671 = vmatprep.subr.mxu0 0.0
    %1672 = vmatpush1.msra.mxu0 0.0
    %1673 = vmatprep.subr.mxu0 0.0
    %1674 = vmatpush1.msra.mxu0 0.0
    %1675 = vmatprep.subr.mxu0 0.0
    %1676 = vmatpush1.msra.mxu0 0.0
    %1677 = vmatprep.subr.mxu0 0.0
    %1678 = vmatpush1.msra.mxu0 0.0
    %1679 = vmatprep.subr.mxu0 0.0
    %1680 = vmatpush1.msra.mxu0 0.0
    %1681 = vmatprep.subr.mxu0 0.0
    %1682 = vmatpush1.msra.mxu0 0.0
    %1683 = vmatprep.subr.mxu0 0.0
    %1684 = vmatpush1.msra.mxu0 0.0
    %1685 = vmatprep.subr.mxu0 0.0
    %1686 = vmatpush1.msra.mxu0 0.0
    %1687 = vmatprep.subr.mxu0 0.0
    %1688 = vmatpush1.msra.mxu0 0.0
    %1689 = vmatprep.subr.mxu0 0.0
    %1690 = vmatpush1.msra.mxu0 0.0
    %1691 = vmatprep.subr.mxu0 0.0
    %1692 = vmatpush1.msra.mxu0 0.0
    %1693 = vmatprep.subr.mxu0 0.0
    %1694 = vmatpush1.msra.mxu0 0.0
    %1695 = vmatprep.mubr.f32.mxu0 0.0
    %1696 = vmatmul.mubr.f32.gmra.mrb[0].mxu0 %v893
    %v1697 = vpop.f32.mrb[0].mxu0
    %v1698 = vadd.f32 %v1628, %v1697
    %v1699 = vpop.f32.mrb[0].mxu0
    %1700 = vdwg.mxu0
    %v1701 = vmax.f32 %v1698, 0.0
    %v1702 = vpack.c.bf16 %v1701, %v1701
    %vm1703 = vcmask 257024
    %1704 = vst.msk [vmem:[%s5] sm:$0xf] %vm1703, %v1702
    // Predicated region
    $region30: #{forward.2} parent=1 // pred_check
      _
    $region31: #{forward.2} parent=1 // pred_check_branch
      %1706 = sbr.rel (0) target = $region33
    $region32: #{forward.2} parent=1 // pred_region
      _
    $region33: #{forward.2} parent=1 // pred_fallthru
      _
    // Predicated region
    $region34: #{forward.2} parent=1 // pred_check
      _
    $region35: #{forward.2} parent=1 // pred_check_branch
      %1708 = sbr.rel (0) target = $region37
    $region36: #{forward.2} parent=1 // pred_region
      _
    $region37: #{forward.2} parent=1 // pred_fallthru
      _
    %1709 = vsyncpa [#allocation3], 1
    %1710 = vsyncpa [#allocation5], 1

</llo_original>
